<compile_context>
chip_gen: v7x
topology: tpu7x:2x2x1
jax: 0.10.0
libtpu: 0.0.40
codegen_flags: <defaults>
</compile_context>

<pallas_src>
import functools

import jax
import jax.numpy as jnp
from jax.experimental import pallas as pl
from jax.experimental.pallas import tpu as pltpu

NEG_BIAS = -1e30          # additive softmax-mask value for non-edges
LEAKY_SLOPE = 0.2         # GATConv default negative_slope


# --------------------------------------------------------------------------- #
# Kernel: one (target row tile, source tile) step of dense multi-head GATConv
# --------------------------------------------------------------------------- #
def _gat_conv_kernel(adst_ref, asrc_ref, hsrc_ref, adj_ref, b_ref, out_ref,
                     m_ref, l_ref, acc_ref, *, heads, f_out, activation):
    """adst_ref : [TM, H]   f32   destination attention scores (row tile)
       asrc_ref : [H, TN]   f32   source attention scores (source tile)
       hsrc_ref : [TN, H*F] bf16  projected source features (source tile)
       adj_ref  : [TM, TN]  int8  adjacency mask (1 = edge incl. self-loop)
       b_ref    : [1, H*F]  f32   bias (concat layout)
       out_ref  : [TM, H*F] f32   written on the last source tile
       m/l_ref  : [TM, H]   f32   online-softmax running max / sum (scratch)
       acc_ref  : [TM, H*F] f32   unnormalized aggregation accumulator (scratch)
    """
    f32 = jnp.float32
    k = pl.program_id(1)

    @pl.when(k == 0)
    def _init():
        m_ref[...] = jnp.full_like(m_ref, NEG_BIAS)
        l_ref[...] = jnp.zeros_like(l_ref)
        acc_ref[...] = jnp.zeros_like(acc_ref)

    a_dst = adst_ref[...]                                   # [TM, H]
    a_src = asrc_ref[...]                                   # [H, TN]
    h_src = hsrc_ref[...]                                   # [TN, H*F] bf16
    # int8 mask -> {0,1} f32 once per tile, shared by all heads.
    mask_f = adj_ref[...].astype(f32)                       # [TM, TN]
    bias_tile = (1.0 - mask_f) * f32(NEG_BIAS)              # 0 edge / -1e30 non-edge

    # Static unroll over heads: heads <= 4, each iteration's [TM, TN] temporaries
    # are consumed by its MXU matmul, and all running state lives in VMEM
    # scratch, so the live set stays bounded at the (now small) tile size.
    for h in range(heads):
        sl = slice(h * f_out, (h + 1) * f_out)
        # e[i, j] = LeakyReLU(a_dst_i + a_src_j, 0.2) for edge j -> i
        e = a_dst[:, h:h + 1] + a_src[h:h + 1, :]           # [TM, TN]
        e = jnp.where(e >= 0.0, e, LEAKY_SLOPE * e)
        logits = e + bias_tile
        m_prev = m_ref[:, h:h + 1]
        m_new = jnp.maximum(m_prev, jnp.max(logits, axis=-1, keepdims=True))
        alpha = jnp.exp(m_prev - m_new)                     # [TM, 1]
        # Re-mask so a fully-masked source tile contributes exactly zero
        # (exp(-1e30 - (-1e30)) would otherwise be 1).
        p = jnp.exp(logits - m_new) * mask_f                # [TM, TN], non-edges -> 0
        l_ref[:, h:h + 1] = (alpha * l_ref[:, h:h + 1]
                             + jnp.sum(p, axis=-1, keepdims=True))
        # Unnormalized aggregation on the MXU (bf16 in, f32 accumulation).
        acc_ref[:, sl] = alpha * acc_ref[:, sl] + jnp.dot(
            p.astype(jnp.bfloat16), h_src[:, sl], preferred_element_type=f32)
        m_ref[:, h:h + 1] = m_new

    @pl.when(k == pl.num_programs(1) - 1)
    def _finalize():
        # Normalize the narrow [TM, F] accumulators (EUP approximate reciprocal)
        # instead of the [TM, TN] score tiles.
        inv = pl.reciprocal(l_ref[...], approx=True)        # [TM, H]
        acc = acc_ref[...]
        if heads > 1:
            cols = [acc[:, h * f_out:(h + 1) * f_out] * inv[:, h:h + 1]
                    for h in range(heads)]
            out = jnp.concatenate(cols, axis=-1)
        else:
            out = acc * inv
        out = out + b_ref[...]
        if activation == "elu":
            # min() keeps the discarded exp branch finite for large positives.
            out = jnp.where(out > 0.0, out, jnp.exp(jnp.minimum(out, 0.0)) - 1.0)
        elif activation == "log_softmax":
            mx = jnp.max(out, axis=-1, keepdims=True)
            z = out - mx
            out = z - jnp.log(jnp.sum(jnp.exp(z), axis=-1, keepdims=True))
        out_ref[...] = out


# --------------------------------------------------------------------------- #
# Tiling / VMEM planning (generation-aware)
# --------------------------------------------------------------------------- #
def _round_up(x, m):
    return (x + m - 1) // m * m


def _vmem_capacity_bytes():
    try:
        return int(pltpu.get_tpu_info().vmem_capacity_bytes)
    except Exception:
        return 64 * 1024 * 1024          # conservative default (v7x per-core VMEM)


def _largest_tile(n_pad, quantum, cap):
    """Largest multiple of `quantum` that divides n_pad and is <= cap."""
    best, t = quantum, quantum
    while t <= cap:
        if n_pad % t == 0:
            best = t
        t += quantum
    return best


def _plan(n):
    """Return (n_pad, tm, tn, vmem_limit_bytes) for an N-node graph."""
    cap = _vmem_capacity_bytes()
    vmem_limit = max(32 * 1024 * 1024, int(cap * 0.85))
    if n <= 512:
        # Small graph: one tile covers everything (full-array blocks).
        n_pad = _round_up(n, 8)
        return n_pad, n_pad, n_pad, vmem_limit
    n_pad = _round_up(n, 128)
    tm_cap = 512 if cap >= 100 * 1024 * 1024 else 256    # smaller row tiles on v7x
    tm = _largest_tile(n_pad, 128, tm_cap)
    tn = _largest_tile(n_pad, 128, 512)
    return n_pad, tm, tn, vmem_limit


# --------------------------------------------------------------------------- #
# Layer wrapper
# --------------------------------------------------------------------------- #
def gat_conv(x, w_fused, asrc_vec, adst_vec, adj_i8, bias, *, heads, f_out,
             activation, tm, tn, vmem_limit):
    """Dense multi-head GATConv; returns [N_pad, heads*f_out] (concat layout)."""
    n_pad = x.shape[0]
    hf = heads * f_out
    assert n_pad % tm == 0 and n_pad % tn == 0

    # ---- hoisted, tile-invariant work (plain XLA, once per layer) ----
    h_all = jnp.dot(x.astype(jnp.bfloat16), w_fused.astype(jnp.bfloat16),
                    preferred_element_type=jnp.float32)            # [N, H*F]
    h_heads = h_all.reshape(n_pad, heads, f_out)
    a_src = jnp.einsum("nhf,hf->hn", h_heads, asrc_vec)            # [H, N]
    a_dst = jnp.einsum("nhf,hf->nh", h_heads, adst_vec)            # [N, H]
    h_bf = h_all.astype(jnp.bfloat16)                              # [N, H*F] bf16

    kernel = functools.partial(_gat_conv_kernel, heads=heads, f_out=f_out,
                               activation=activation)
    return pl.pallas_call(
        kernel,
        out_shape=jax.ShapeDtypeStruct((n_pad, hf), jnp.float32),
        grid=(n_pad // tm, n_pad // tn),
        in_specs=[
            pl.BlockSpec((tm, heads), lambda i, k: (i, 0)),   # a_dst, row tile
            pl.BlockSpec((heads, tn), lambda i, k: (0, k)),   # a_src, source tile
            pl.BlockSpec((tn, hf), lambda i, k: (k, 0)),      # projected sources
            pl.BlockSpec((tm, tn), lambda i, k: (i, k)),      # int8 adjacency tile
            pl.BlockSpec((1, hf), lambda i, k: (0, 0)),       # bias
        ],
        out_specs=pl.BlockSpec((tm, hf), lambda i, k: (i, 0)),
        scratch_shapes=[
            pltpu.VMEM((tm, heads), jnp.float32),              # running max
            pltpu.VMEM((tm, heads), jnp.float32),              # running sum
            pltpu.VMEM((tm, hf), jnp.float32),                 # unnormalized acc
        ],
        compiler_params=pltpu.CompilerParams(
            dimension_semantics=("parallel", "arbitrary"),
            vmem_limit_bytes=vmem_limit),
    )(a_dst, a_src, h_bf, adj_i8, bias)


def _fuse_heads(w):
    """[H, F_in, F_out] -> [F_in, H*F_out]; head h owns columns h*F_out:(h+1)*F_out."""
    h, f_in, f_out = w.shape
    return jnp.transpose(w, (1, 0, 2)).reshape(f_in, h * f_out)


def gat_forward(params, x, adj_i8):
    """x: [N, F_in] f32; adj_i8: [N, N] int8 mask (adj[target, source], self-loops set)."""
    n = x.shape[0]
    n_pad, tm, tn, vmem_limit = _plan(n)

    if n_pad != n:
        x = jnp.pad(x, ((0, n_pad - n), (0, 0)))
        adj_p = jnp.zeros((n_pad, n_pad), jnp.int8).at[:n, :n].set(adj_i8)
        pad_idx = jnp.arange(n, n_pad)
        adj_p = adj_p.at[pad_idx, pad_idx].set(1)   # self-loop keeps softmax finite
    else:
        adj_p = adj_i8

    heads1, _, hid = params["w1"].shape
    # conv1: 4 heads, concat=True -> lane-dense [N, 4*hid]; bias + ELU fused.
    h1 = gat_conv(x, _fuse_heads(params["w1"]),
                  params["asrc1"].reshape(heads1, hid),
                  params["adst1"].reshape(heads1, hid),
                  adj_p, params["b1"][None, :],
                  heads=heads1, f_out=hid, activation="elu",
                  tm=tm, tn=tn, vmem_limit=vmem_limit)

    # TODO(synk): training-mode dropout (p=0.5 on features and attention) not
    # implemented -- inference semantics only (dropout is identity).

    heads2, _, out_dim = params["w2"].shape
    # conv2: 1 head, concat=False (mean over a single head == identity);
    # bias + log_softmax fused in-kernel.
    out = gat_conv(h1, _fuse_heads(params["w2"]),
                   params["asrc2"].reshape(heads2, out_dim),
                   params["adst2"].reshape(heads2, out_dim),
                   adj_p, params["b2"][None, :],
                   heads=heads2, f_out=out_dim, activation="log_softmax",
                   tm=tm, tn=tn, vmem_limit=vmem_limit)
    return out[:n]


# --------------------------------------------------------------------------- #
# Parameter init (PyG GATConv-style glorot)
# --------------------------------------------------------------------------- #
def _glorot(key, shape):
    fan_in, fan_out = shape[-2], shape[-1]
    limit = (6.0 / (fan_in + fan_out)) ** 0.5
    return jax.random.uniform(key, shape, jnp.float32, -limit, limit)


def init_params(key, in_dim, hid_dim, out_dim, heads=4):
    ks = jax.random.split(key, 8)
    return {
        # conv1: heads=4, concat=True
        "w1": _glorot(ks[0], (heads, in_dim, hid_dim)),
        "asrc1": _glorot(ks[1], (heads, 1, hid_dim)),
        "adst1": _glorot(ks[2], (heads, 1, hid_dim)),
        "b1": jnp.zeros((heads * hid_dim,), jnp.float32),
        # conv2: heads=1, concat=False
        "w2": _glorot(ks[3], (1, heads * hid_dim, out_dim)),
        "asrc2": _glorot(ks[4], (1, 1, out_dim)),
        "adst2": _glorot(ks[5], (1, 1, out_dim)),
        "b2": jnp.zeros((out_dim,), jnp.float32),
    }


if __name__ == "__main__":
    N, IN_DIM, HID_DIM, OUT_DIM, HEADS = 16, 8, 8, 4, 4
    key = jax.random.PRNGKey(0)
    k_x, k_src, k_dst, k_p = jax.random.split(key, 4)

    # node features
    x = jax.random.normal(k_x, (N, IN_DIM), jnp.float32)

    # random edge_index [2, E] (PyG convention: row 0 = source, row 1 = target)
    E = 40
    src = jax.random.randint(k_src, (E,), 0, N)
    dst = jax.random.randint(k_dst, (E,), 0, N)

    # dense adjacency adj[target, source] with self-loops, stored as an int8 mask
    # (1 = edge, 0 = none); the -1e30 additive softmax bias is built in-kernel.
    adj = jnp.zeros((N, N), jnp.int8).at[dst, src].set(1)
    adj = jnp.maximum(adj, jnp.eye(N, dtype=jnp.int8))

    params = init_params(k_p, IN_DIM, HID_DIM, OUT_DIM, heads=HEADS)

    out = jax.jit(gat_forward)(params, x, adj)
    jax.block_until_ready(out)

    assert out.shape == (N, OUT_DIM)
    # log_softmax rows must sum to ~1 in prob space
    assert bool(jnp.allclose(jnp.sum(jnp.exp(out), axis=1), 1.0, atol=1e-4))
    print("KERNEL_OK")
</pallas_src>

<mosaic_0001>
module attributes {stable_mosaic.version = 11 : i64} {
  func.func @_gat_conv_kernel(%arg0: i32, %arg1: i32, %arg2: memref<16x4xf32, #tpu.memory_space<vmem>>, %arg3: memref<4x16xf32, #tpu.memory_space<vmem>>, %arg4: memref<16x32xbf16, #tpu.memory_space<vmem>>, %arg5: memref<16x16xi8, #tpu.memory_space<vmem>>, %arg6: memref<1x32xf32, #tpu.memory_space<vmem>>, %arg7: memref<16x32xf32, #tpu.memory_space<vmem>>, %arg8: memref<16x4xf32, #tpu.memory_space<vmem>>, %arg9: memref<16x4xf32, #tpu.memory_space<vmem>>, %arg10: memref<16x32xf32, #tpu.memory_space<vmem>>) attributes {dimension_semantics = [#tpu.dimension_semantics<parallel>, #tpu.dimension_semantics<arbitrary>], iteration_bounds = array<i64: 1, 1>, scalar_prefetch = 0 : i64, scratch_operands = 3 : i64, tpu.core_type = #tpu.core_type<tc>, window_params = [{transform_indices = @transform_0, window_bounds = array<i64: 16, 4>}, {transform_indices = @transform_1, window_bounds = array<i64: 4, 16>}, {transform_indices = @transform_2, window_bounds = array<i64: 16, 32>}, {transform_indices = @transform_3, window_bounds = array<i64: 16, 16>}, {pipeline_mode = #tpu.pipeline_mode<synchronous>, transform_indices = @transform_4, window_bounds = array<i64: 1, 32>}, {transform_indices = @transform_5, window_bounds = array<i64: 16, 32>}]} {
    %c0_i32 = arith.constant 0 : i32
    %0 = arith.cmpi eq, %arg1, %c0_i32 : i32
    %1 = arith.extui %0 : i1 to i32
    %c0_i32_0 = arith.constant 0 : i32
    %2 = arith.cmpi ne, %1, %c0_i32_0 : i32
    scf.if %2 {
      %cst_73 = arith.constant -1.000000e+30 : f32
      %159 = vector.broadcast %cst_73 : f32 to vector<16x4xf32>
      %c0_74 = arith.constant 0 : index
      %c0_75 = arith.constant 0 : index
      %160 = vector.load %arg8[%c0_74, %c0_75] : memref<16x4xf32, #tpu.memory_space<vmem>>, vector<16x4xf32>
      tpu.vector_store %arg8[%c0_74, %c0_75], %159 {strides = array<i32>} : memref<16x4xf32, #tpu.memory_space<vmem>>, vector<16x4xf32>,
      %cst_76 = arith.constant 0.000000e+00 : f32
      %161 = vector.broadcast %cst_76 : f32 to vector<16x4xf32>
      %c0_77 = arith.constant 0 : index
      %c0_78 = arith.constant 0 : index
      %162 = vector.load %arg9[%c0_77, %c0_78] : memref<16x4xf32, #tpu.memory_space<vmem>>, vector<16x4xf32>
      tpu.vector_store %arg9[%c0_77, %c0_78], %161 {strides = array<i32>} : memref<16x4xf32, #tpu.memory_space<vmem>>, vector<16x4xf32>,
      %cst_79 = arith.constant 0.000000e+00 : f32
      %163 = vector.broadcast %cst_79 : f32 to vector<16x32xf32>
      %c0_80 = arith.constant 0 : index
      %c0_81 = arith.constant 0 : index
      %164 = vector.load %arg10[%c0_80, %c0_81] : memref<16x32xf32, #tpu.memory_space<vmem>>, vector<16x32xf32>
      tpu.vector_store %arg10[%c0_80, %c0_81], %163 {strides = array<i32>} : memref<16x32xf32, #tpu.memory_space<vmem>>, vector<16x32xf32>,
    } else {
    }
    %c0 = arith.constant 0 : index
    %c0_1 = arith.constant 0 : index
    %3 = vector.load %arg2[%c0, %c0_1] : memref<16x4xf32, #tpu.memory_space<vmem>>, vector<16x4xf32>
    %c0_2 = arith.constant 0 : index
    %c0_3 = arith.constant 0 : index
    %4 = vector.load %arg3[%c0_2, %c0_3] : memref<4x16xf32, #tpu.memory_space<vmem>>, vector<4x16xf32>
    %c0_4 = arith.constant 0 : index
    %c0_5 = arith.constant 0 : index
    %5 = vector.load %arg4[%c0_4, %c0_5] : memref<16x32xbf16, #tpu.memory_space<vmem>>, vector<16x32xbf16>
    %c0_6 = arith.constant 0 : index
    %c0_7 = arith.constant 0 : index
    %6 = vector.load %arg5[%c0_6, %c0_7] : memref<16x16xi8, #tpu.memory_space<vmem>>, vector<16x16xi8>
    %7 = arith.sitofp %6 : vector<16x16xi8> to vector<16x16xf32>
    %cst = arith.constant 1.000000e+00 : f32
    %8 = vector.broadcast %cst : f32 to vector<16x16xf32>
    %9 = arith.subf %8, %7 : vector<16x16xf32>
    %cst_8 = arith.constant -1.000000e+30 : f32
    %10 = vector.broadcast %cst_8 : f32 to vector<16x16xf32>
    %11 = arith.mulf %9, %10 : vector<16x16xf32>
    %12 = vector.extract_strided_slice %3 {offsets = [0, 0], sizes = [16, 1], strides = [1, 1]} : vector<16x4xf32> to vector<16x1xf32>
    %13 = vector.extract_strided_slice %4 {offsets = [0, 0], sizes = [1, 16], strides = [1, 1]} : vector<4x16xf32> to vector<1x16xf32>
    %14 = vector.broadcast %12 : vector<16x1xf32> to vector<16x16xf32>
    %15 = vector.broadcast %13 : vector<1x16xf32> to vector<16x16xf32>
    %16 = arith.addf %14, %15 : vector<16x16xf32>
    %cst_9 = arith.constant 0.000000e+00 : f32
    %17 = vector.broadcast %cst_9 : f32 to vector<16x16xf32>
    %18 = arith.cmpf oge, %16, %17 : vector<16x16xf32>
    %cst_10 = arith.constant 2.000000e-01 : f32
    %19 = vector.broadcast %cst_10 : f32 to vector<16x16xf32>
    %20 = arith.mulf %19, %16 : vector<16x16xf32>
    %21 = arith.select %18, %16, %20 : vector<16x16xi1>, vector<16x16xf32>
    %22 = arith.addf %21, %11 : vector<16x16xf32>
    %c0_11 = arith.constant 0 : index
    %c0_12 = arith.constant 0 : index
    %23 = vector.load %arg8[%c0_11, %c0_12] : memref<16x4xf32, #tpu.memory_space<vmem>>, vector<16x1xf32>
    %cst_13 = arith.constant dense<0xFF800000> : vector<16xf32>
    %24 = vector.multi_reduction <maximumf>, %22, %cst_13 [1] : vector<16x16xf32> to vector<16xf32>
    %25 = vector.shape_cast %24 : vector<16xf32> to vector<16x1xf32>
    %26 = arith.maximumf %23, %25 : vector<16x1xf32>
    %27 = arith.subf %23, %26 : vector<16x1xf32>
    %28 = math.exp %27 : vector<16x1xf32>
    %29 = vector.broadcast %26 : vector<16x1xf32> to vector<16x16xf32>
    %30 = arith.subf %22, %29 : vector<16x16xf32>
    %31 = math.exp %30 : vector<16x16xf32>
    %32 = arith.mulf %31, %7 : vector<16x16xf32>
    %c0_14 = arith.constant 0 : index
    %c0_15 = arith.constant 0 : index
    %33 = vector.load %arg9[%c0_14, %c0_15] : memref<16x4xf32, #tpu.memory_space<vmem>>, vector<16x1xf32>
    %34 = arith.mulf %28, %33 : vector<16x1xf32>
    %cst_16 = arith.constant dense<0.000000e+00> : vector<16xf32>
    %35 = vector.multi_reduction <add>, %32, %cst_16 [1] : vector<16x16xf32> to vector<16xf32>
    %36 = vector.shape_cast %35 : vector<16xf32> to vector<16x1xf32>
    %37 = arith.addf %34, %36 : vector<16x1xf32>
    %c0_17 = arith.constant 0 : index
    %c0_18 = arith.constant 0 : index
    %38 = vector.load %arg9[%c0_17, %c0_18] : memref<16x4xf32, #tpu.memory_space<vmem>>, vector<16x1xf32>
    tpu.vector_store %arg9[%c0_17, %c0_18], %37 {strides = array<i32>} : memref<16x4xf32, #tpu.memory_space<vmem>>, vector<16x1xf32>,
    %c0_19 = arith.constant 0 : index
    %c0_20 = arith.constant 0 : index
    %39 = vector.load %arg10[%c0_19, %c0_20] : memref<16x32xf32, #tpu.memory_space<vmem>>, vector<16x8xf32>
    %40 = vector.broadcast %28 : vector<16x1xf32> to vector<16x8xf32>
    %41 = arith.mulf %40, %39 : vector<16x8xf32>
    %42 = arith.truncf %32 : vector<16x16xf32> to vector<16x16xbf16>
    %43 = vector.extract_strided_slice %5 {offsets = [0, 0], sizes = [16, 8], strides = [1, 1]} : vector<16x32xbf16> to vector<16x8xbf16>
    %cst_21 = arith.constant dense<0.000000e+00> : vector<16x8xf32>
    %44 = tpu.matmul %42, %43, %cst_21 {dimension_numbers = #tpu.dot_dimension_numbers<[1], [0], [0], [1], [0, 0, 1, 1], [], []>} : vector<16x16xbf16>, vector<16x8xbf16>, vector<16x8xf32> -> vector<16x8xf32>
    %45 = arith.addf %41, %44 : vector<16x8xf32>
    %c0_22 = arith.constant 0 : index
    %c0_23 = arith.constant 0 : index
    %46 = vector.load %arg10[%c0_22, %c0_23] : memref<16x32xf32, #tpu.memory_space<vmem>>, vector<16x8xf32>
    tpu.vector_store %arg10[%c0_22, %c0_23], %45 {strides = array<i32>} : memref<16x32xf32, #tpu.memory_space<vmem>>, vector<16x8xf32>,
    %c0_24 = arith.constant 0 : index
    %c0_25 = arith.constant 0 : index
    %47 = vector.load %arg8[%c0_24, %c0_25] : memref<16x4xf32, #tpu.memory_space<vmem>>, vector<16x1xf32>
    tpu.vector_store %arg8[%c0_24, %c0_25], %26 {strides = array<i32>} : memref<16x4xf32, #tpu.memory_space<vmem>>, vector<16x1xf32>,
    %48 = vector.extract_strided_slice %3 {offsets = [0, 1], sizes = [16, 1], strides = [1, 1]} : vector<16x4xf32> to vector<16x1xf32>
    %49 = vector.extract_strided_slice %4 {offsets = [1, 0], sizes = [1, 16], strides = [1, 1]} : vector<4x16xf32> to vector<1x16xf32>
    %50 = vector.broadcast %48 : vector<16x1xf32> to vector<16x16xf32>
    %51 = vector.broadcast %49 : vector<1x16xf32> to vector<16x16xf32>
    %52 = arith.addf %50, %51 : vector<16x16xf32>
    %cst_26 = arith.constant 0.000000e+00 : f32
    %53 = vector.broadcast %cst_26 : f32 to vector<16x16xf32>
    %54 = arith.cmpf oge, %52, %53 : vector<16x16xf32>
    %cst_27 = arith.constant 2.000000e-01 : f32
    %55 = vector.broadcast %cst_27 : f32 to vector<16x16xf32>
    %56 = arith.mulf %55, %52 : vector<16x16xf32>
    %57 = arith.select %54, %52, %56 : vector<16x16xi1>, vector<16x16xf32>
    %58 = arith.addf %57, %11 : vector<16x16xf32>
    %c0_28 = arith.constant 0 : index
    %c1 = arith.constant 1 : index
    %59 = vector.load %arg8[%c0_28, %c1] : memref<16x4xf32, #tpu.memory_space<vmem>>, vector<16x1xf32>
    %cst_29 = arith.constant dense<0xFF800000> : vector<16xf32>
    %60 = vector.multi_reduction <maximumf>, %58, %cst_29 [1] : vector<16x16xf32> to vector<16xf32>
    %61 = vector.shape_cast %60 : vector<16xf32> to vector<16x1xf32>
    %62 = arith.maximumf %59, %61 : vector<16x1xf32>
    %63 = arith.subf %59, %62 : vector<16x1xf32>
    %64 = math.exp %63 : vector<16x1xf32>
    %65 = vector.broadcast %62 : vector<16x1xf32> to vector<16x16xf32>
    %66 = arith.subf %58, %65 : vector<16x16xf32>
    %67 = math.exp %66 : vector<16x16xf32>
    %68 = arith.mulf %67, %7 : vector<16x16xf32>
    %c0_30 = arith.constant 0 : index
    %c1_31 = arith.constant 1 : index
    %69 = vector.load %arg9[%c0_30, %c1_31] : memref<16x4xf32, #tpu.memory_space<vmem>>, vector<16x1xf32>
    %70 = arith.mulf %64, %69 : vector<16x1xf32>
    %cst_32 = arith.constant dense<0.000000e+00> : vector<16xf32>
    %71 = vector.multi_reduction <add>, %68, %cst_32 [1] : vector<16x16xf32> to vector<16xf32>
    %72 = vector.shape_cast %71 : vector<16xf32> to vector<16x1xf32>
    %73 = arith.addf %70, %72 : vector<16x1xf32>
    %c0_33 = arith.constant 0 : index
    %c1_34 = arith.constant 1 : index
    %74 = vector.load %arg9[%c0_33, %c1_34] : memref<16x4xf32, #tpu.memory_space<vmem>>, vector<16x1xf32>
    tpu.vector_store %arg9[%c0_33, %c1_34], %73 {strides = array<i32>} : memref<16x4xf32, #tpu.memory_space<vmem>>, vector<16x1xf32>,
    %c0_35 = arith.constant 0 : index
    %c8 = arith.constant 8 : index
    %75 = vector.load %arg10[%c0_35, %c8] : memref<16x32xf32, #tpu.memory_space<vmem>>, vector<16x8xf32>
    %76 = vector.broadcast %64 : vector<16x1xf32> to vector<16x8xf32>
    %77 = arith.mulf %76, %75 : vector<16x8xf32>
    %78 = arith.truncf %68 : vector<16x16xf32> to vector<16x16xbf16>
    %79 = vector.extract_strided_slice %5 {offsets = [0, 8], sizes = [16, 8], strides = [1, 1]} : vector<16x32xbf16> to vector<16x8xbf16>
    %cst_36 = arith.constant dense<0.000000e+00> : vector<16x8xf32>
    %80 = tpu.matmul %78, %79, %cst_36 {dimension_numbers = #tpu.dot_dimension_numbers<[1], [0], [0], [1], [0, 0, 1, 1], [], []>} : vector<16x16xbf16>, vector<16x8xbf16>, vector<16x8xf32> -> vector<16x8xf32>
    %81 = arith.addf %77, %80 : vector<16x8xf32>
    %c0_37 = arith.constant 0 : index
    %c8_38 = arith.constant 8 : index
    %82 = vector.load %arg10[%c0_37, %c8_38] : memref<16x32xf32, #tpu.memory_space<vmem>>, vector<16x8xf32>
    tpu.vector_store %arg10[%c0_37, %c8_38], %81 {strides = array<i32>} : memref<16x32xf32, #tpu.memory_space<vmem>>, vector<16x8xf32>,
    %c0_39 = arith.constant 0 : index
    %c1_40 = arith.constant 1 : index
    %83 = vector.load %arg8[%c0_39, %c1_40] : memref<16x4xf32, #tpu.memory_space<vmem>>, vector<16x1xf32>
    tpu.vector_store %arg8[%c0_39, %c1_40], %62 {strides = array<i32>} : memref<16x4xf32, #tpu.memory_space<vmem>>, vector<16x1xf32>,
    %84 = vector.extract_strided_slice %3 {offsets = [0, 2], sizes = [16, 1], strides = [1, 1]} : vector<16x4xf32> to vector<16x1xf32>
    %85 = vector.extract_strided_slice %4 {offsets = [2, 0], sizes = [1, 16], strides = [1, 1]} : vector<4x16xf32> to vector<1x16xf32>
    %86 = vector.broadcast %84 : vector<16x1xf32> to vector<16x16xf32>
    %87 = vector.broadcast %85 : vector<1x16xf32> to vector<16x16xf32>
    %88 = arith.addf %86, %87 : vector<16x16xf32>
    %cst_41 = arith.constant 0.000000e+00 : f32
    %89 = vector.broadcast %cst_41 : f32 to vector<16x16xf32>
    %90 = arith.cmpf oge, %88, %89 : vector<16x16xf32>
    %cst_42 = arith.constant 2.000000e-01 : f32
    %91 = vector.broadcast %cst_42 : f32 to vector<16x16xf32>
    %92 = arith.mulf %91, %88 : vector<16x16xf32>
    %93 = arith.select %90, %88, %92 : vector<16x16xi1>, vector<16x16xf32>
    %94 = arith.addf %93, %11 : vector<16x16xf32>
    %c0_43 = arith.constant 0 : index
    %c2 = arith.constant 2 : index
    %95 = vector.load %arg8[%c0_43, %c2] : memref<16x4xf32, #tpu.memory_space<vmem>>, vector<16x1xf32>
    %cst_44 = arith.constant dense<0xFF800000> : vector<16xf32>
    %96 = vector.multi_reduction <maximumf>, %94, %cst_44 [1] : vector<16x16xf32> to vector<16xf32>
    %97 = vector.shape_cast %96 : vector<16xf32> to vector<16x1xf32>
    %98 = arith.maximumf %95, %97 : vector<16x1xf32>
    %99 = arith.subf %95, %98 : vector<16x1xf32>
    %100 = math.exp %99 : vector<16x1xf32>
    %101 = vector.broadcast %98 : vector<16x1xf32> to vector<16x16xf32>
    %102 = arith.subf %94, %101 : vector<16x16xf32>
    %103 = math.exp %102 : vector<16x16xf32>
    %104 = arith.mulf %103, %7 : vector<16x16xf32>
    %c0_45 = arith.constant 0 : index
    %c2_46 = arith.constant 2 : index
    %105 = vector.load %arg9[%c0_45, %c2_46] : memref<16x4xf32, #tpu.memory_space<vmem>>, vector<16x1xf32>
    %106 = arith.mulf %100, %105 : vector<16x1xf32>
    %cst_47 = arith.constant dense<0.000000e+00> : vector<16xf32>
    %107 = vector.multi_reduction <add>, %104, %cst_47 [1] : vector<16x16xf32> to vector<16xf32>
    %108 = vector.shape_cast %107 : vector<16xf32> to vector<16x1xf32>
    %109 = arith.addf %106, %108 : vector<16x1xf32>
    %c0_48 = arith.constant 0 : index
    %c2_49 = arith.constant 2 : index
    %110 = vector.load %arg9[%c0_48, %c2_49] : memref<16x4xf32, #tpu.memory_space<vmem>>, vector<16x1xf32>
    tpu.vector_store %arg9[%c0_48, %c2_49], %109 {strides = array<i32>} : memref<16x4xf32, #tpu.memory_space<vmem>>, vector<16x1xf32>,
    %c0_50 = arith.constant 0 : index
    %c16 = arith.constant 16 : index
    %111 = vector.load %arg10[%c0_50, %c16] : memref<16x32xf32, #tpu.memory_space<vmem>>, vector<16x8xf32>
    %112 = vector.broadcast %100 : vector<16x1xf32> to vector<16x8xf32>
    %113 = arith.mulf %112, %111 : vector<16x8xf32>
    %114 = arith.truncf %104 : vector<16x16xf32> to vector<16x16xbf16>
    %115 = vector.extract_strided_slice %5 {offsets = [0, 16], sizes = [16, 8], strides = [1, 1]} : vector<16x32xbf16> to vector<16x8xbf16>
    %cst_51 = arith.constant dense<0.000000e+00> : vector<16x8xf32>
    %116 = tpu.matmul %114, %115, %cst_51 {dimension_numbers = #tpu.dot_dimension_numbers<[1], [0], [0], [1], [0, 0, 1, 1], [], []>} : vector<16x16xbf16>, vector<16x8xbf16>, vector<16x8xf32> -> vector<16x8xf32>
    %117 = arith.addf %113, %116 : vector<16x8xf32>
    %c0_52 = arith.constant 0 : index
    %c16_53 = arith.constant 16 : index
    %118 = vector.load %arg10[%c0_52, %c16_53] : memref<16x32xf32, #tpu.memory_space<vmem>>, vector<16x8xf32>
    tpu.vector_store %arg10[%c0_52, %c16_53], %117 {strides = array<i32>} : memref<16x32xf32, #tpu.memory_space<vmem>>, vector<16x8xf32>,
    %c0_54 = arith.constant 0 : index
    %c2_55 = arith.constant 2 : index
    %119 = vector.load %arg8[%c0_54, %c2_55] : memref<16x4xf32, #tpu.memory_space<vmem>>, vector<16x1xf32>
    tpu.vector_store %arg8[%c0_54, %c2_55], %98 {strides = array<i32>} : memref<16x4xf32, #tpu.memory_space<vmem>>, vector<16x1xf32>,
    %120 = vector.extract_strided_slice %3 {offsets = [0, 3], sizes = [16, 1], strides = [1, 1]} : vector<16x4xf32> to vector<16x1xf32>
    %121 = vector.extract_strided_slice %4 {offsets = [3, 0], sizes = [1, 16], strides = [1, 1]} : vector<4x16xf32> to vector<1x16xf32>
    %122 = vector.broadcast %120 : vector<16x1xf32> to vector<16x16xf32>
    %123 = vector.broadcast %121 : vector<1x16xf32> to vector<16x16xf32>
    %124 = arith.addf %122, %123 : vector<16x16xf32>
    %cst_56 = arith.constant 0.000000e+00 : f32
    %125 = vector.broadcast %cst_56 : f32 to vector<16x16xf32>
    %126 = arith.cmpf oge, %124, %125 : vector<16x16xf32>
    %cst_57 = arith.constant 2.000000e-01 : f32
    %127 = vector.broadcast %cst_57 : f32 to vector<16x16xf32>
    %128 = arith.mulf %127, %124 : vector<16x16xf32>
    %129 = arith.select %126, %124, %128 : vector<16x16xi1>, vector<16x16xf32>
    %130 = arith.addf %129, %11 : vector<16x16xf32>
    %c0_58 = arith.constant 0 : index
    %c3 = arith.constant 3 : index
    %131 = vector.load %arg8[%c0_58, %c3] : memref<16x4xf32, #tpu.memory_space<vmem>>, vector<16x1xf32>
    %cst_59 = arith.constant dense<0xFF800000> : vector<16xf32>
    %132 = vector.multi_reduction <maximumf>, %130, %cst_59 [1] : vector<16x16xf32> to vector<16xf32>
    %133 = vector.shape_cast %132 : vector<16xf32> to vector<16x1xf32>
    %134 = arith.maximumf %131, %133 : vector<16x1xf32>
    %135 = arith.subf %131, %134 : vector<16x1xf32>
    %136 = math.exp %135 : vector<16x1xf32>
    %137 = vector.broadcast %134 : vector<16x1xf32> to vector<16x16xf32>
    %138 = arith.subf %130, %137 : vector<16x16xf32>
    %139 = math.exp %138 : vector<16x16xf32>
    %140 = arith.mulf %139, %7 : vector<16x16xf32>
    %c0_60 = arith.constant 0 : index
    %c3_61 = arith.constant 3 : index
    %141 = vector.load %arg9[%c0_60, %c3_61] : memref<16x4xf32, #tpu.memory_space<vmem>>, vector<16x1xf32>
    %142 = arith.mulf %136, %141 : vector<16x1xf32>
    %cst_62 = arith.constant dense<0.000000e+00> : vector<16xf32>
    %143 = vector.multi_reduction <add>, %140, %cst_62 [1] : vector<16x16xf32> to vector<16xf32>
    %144 = vector.shape_cast %143 : vector<16xf32> to vector<16x1xf32>
    %145 = arith.addf %142, %144 : vector<16x1xf32>
    %c0_63 = arith.constant 0 : index
    %c3_64 = arith.constant 3 : index
    %146 = vector.load %arg9[%c0_63, %c3_64] : memref<16x4xf32, #tpu.memory_space<vmem>>, vector<16x1xf32>
    tpu.vector_store %arg9[%c0_63, %c3_64], %145 {strides = array<i32>} : memref<16x4xf32, #tpu.memory_space<vmem>>, vector<16x1xf32>,
    %c0_65 = arith.constant 0 : index
    %c24 = arith.constant 24 : index
    %147 = vector.load %arg10[%c0_65, %c24] : memref<16x32xf32, #tpu.memory_space<vmem>>, vector<16x8xf32>
    %148 = vector.broadcast %136 : vector<16x1xf32> to vector<16x8xf32>
    %149 = arith.mulf %148, %147 : vector<16x8xf32>
    %150 = arith.truncf %140 : vector<16x16xf32> to vector<16x16xbf16>
    %151 = vector.extract_strided_slice %5 {offsets = [0, 24], sizes = [16, 8], strides = [1, 1]} : vector<16x32xbf16> to vector<16x8xbf16>
    %cst_66 = arith.constant dense<0.000000e+00> : vector<16x8xf32>
    %152 = tpu.matmul %150, %151, %cst_66 {dimension_numbers = #tpu.dot_dimension_numbers<[1], [0], [0], [1], [0, 0, 1, 1], [], []>} : vector<16x16xbf16>, vector<16x8xbf16>, vector<16x8xf32> -> vector<16x8xf32>
    %153 = arith.addf %149, %152 : vector<16x8xf32>
    %c0_67 = arith.constant 0 : index
    %c24_68 = arith.constant 24 : index
    %154 = vector.load %arg10[%c0_67, %c24_68] : memref<16x32xf32, #tpu.memory_space<vmem>>, vector<16x8xf32>
    tpu.vector_store %arg10[%c0_67, %c24_68], %153 {strides = array<i32>} : memref<16x32xf32, #tpu.memory_space<vmem>>, vector<16x8xf32>,
    %c0_69 = arith.constant 0 : index
    %c3_70 = arith.constant 3 : index
    %155 = vector.load %arg8[%c0_69, %c3_70] : memref<16x4xf32, #tpu.memory_space<vmem>>, vector<16x1xf32>
    tpu.vector_store %arg8[%c0_69, %c3_70], %134 {strides = array<i32>} : memref<16x4xf32, #tpu.memory_space<vmem>>, vector<16x1xf32>,
    %c0_i32_71 = arith.constant 0 : i32
    %156 = arith.cmpi eq, %arg1, %c0_i32_71 : i32
    %157 = arith.extui %156 : i1 to i32
    %c0_i32_72 = arith.constant 0 : i32
    %158 = arith.cmpi ne, %157, %c0_i32_72 : i32
    scf.if %158 {
      %c0_73 = arith.constant 0 : index
      %c0_74 = arith.constant 0 : index
      %159 = vector.load %arg9[%c0_73, %c0_74] : memref<16x4xf32, #tpu.memory_space<vmem>>, vector<16x4xf32>
      %160 = tpu.reciprocal %159 {approx = true} : vector<16x4xf32> -> vector<16x4xf32>
      %c0_75 = arith.constant 0 : index
      %c0_76 = arith.constant 0 : index
      %161 = vector.load %arg10[%c0_75, %c0_76] : memref<16x32xf32, #tpu.memory_space<vmem>>, vector<16x32xf32>
      %162 = vector.extract_strided_slice %161 {offsets = [0, 0], sizes = [16, 8], strides = [1, 1]} : vector<16x32xf32> to vector<16x8xf32>
      %163 = vector.extract_strided_slice %160 {offsets = [0, 0], sizes = [16, 1], strides = [1, 1]} : vector<16x4xf32> to vector<16x1xf32>
      %164 = vector.broadcast %163 : vector<16x1xf32> to vector<16x8xf32>
      %165 = arith.mulf %162, %164 : vector<16x8xf32>
      %166 = vector.extract_strided_slice %161 {offsets = [0, 8], sizes = [16, 8], strides = [1, 1]} : vector<16x32xf32> to vector<16x8xf32>
      %167 = vector.extract_strided_slice %160 {offsets = [0, 1], sizes = [16, 1], strides = [1, 1]} : vector<16x4xf32> to vector<16x1xf32>
      %168 = vector.broadcast %167 : vector<16x1xf32> to vector<16x8xf32>
      %169 = arith.mulf %166, %168 : vector<16x8xf32>
      %170 = vector.extract_strided_slice %161 {offsets = [0, 16], sizes = [16, 8], strides = [1, 1]} : vector<16x32xf32> to vector<16x8xf32>
      %171 = vector.extract_strided_slice %160 {offsets = [0, 2], sizes = [16, 1], strides = [1, 1]} : vector<16x4xf32> to vector<16x1xf32>
      %172 = vector.broadcast %171 : vector<16x1xf32> to vector<16x8xf32>
      %173 = arith.mulf %170, %172 : vector<16x8xf32>
      %174 = vector.extract_strided_slice %161 {offsets = [0, 24], sizes = [16, 8], strides = [1, 1]} : vector<16x32xf32> to vector<16x8xf32>
      %175 = vector.extract_strided_slice %160 {offsets = [0, 3], sizes = [16, 1], strides = [1, 1]} : vector<16x4xf32> to vector<16x1xf32>
      %176 = vector.broadcast %175 : vector<16x1xf32> to vector<16x8xf32>
      %177 = arith.mulf %174, %176 : vector<16x8xf32>
      %178 = tpu.concatenate %165, %169, %173, %177 in 1 : vector<16x8xf32>, vector<16x8xf32>, vector<16x8xf32>, vector<16x8xf32> -> vector<16x32xf32>
      %c0_77 = arith.constant 0 : index
      %c0_78 = arith.constant 0 : index
      %179 = vector.load %arg6[%c0_77, %c0_78] : memref<1x32xf32, #tpu.memory_space<vmem>>, vector<1x32xf32>
      %180 = vector.broadcast %179 : vector<1x32xf32> to vector<16x32xf32>
      %181 = arith.addf %178, %180 : vector<16x32xf32>
      %cst_79 = arith.constant 0.000000e+00 : f32
      %182 = vector.broadcast %cst_79 : f32 to vector<16x32xf32>
      %183 = arith.cmpf ogt, %181, %182 : vector<16x32xf32>
      %cst_80 = arith.constant 0.000000e+00 : f32
      %184 = vector.broadcast %cst_80 : f32 to vector<16x32xf32>
      %185 = arith.minimumf %181, %184 : vector<16x32xf32>
      %186 = math.exp %185 : vector<16x32xf32>
      %cst_81 = arith.constant 1.000000e+00 : f32
      %187 = vector.broadcast %cst_81 : f32 to vector<16x32xf32>
      %188 = arith.subf %186, %187 : vector<16x32xf32>
      %189 = arith.select %183, %181, %188 : vector<16x32xi1>, vector<16x32xf32>
      %c0_82 = arith.constant 0 : index
      %c0_83 = arith.constant 0 : index
      %190 = vector.load %arg7[%c0_82, %c0_83] : memref<16x32xf32, #tpu.memory_space<vmem>>, vector<16x32xf32>
      tpu.vector_store %arg7[%c0_82, %c0_83], %189 {strides = array<i32>} : memref<16x32xf32, #tpu.memory_space<vmem>>, vector<16x32xf32>,
    } else {
    }
    return
  }
  func.func @transform_0(%arg0: i32, %arg1: i32) -> (i32, i32) {
    %c0_i32 = arith.constant 0 : i32
    %c0_i32_0 = arith.constant 0 : i32
    return %arg0, %c0_i32 : i32, i32
  }
  func.func @transform_1(%arg0: i32, %arg1: i32) -> (i32, i32) {
    %c0_i32 = arith.constant 0 : i32
    %c0_i32_0 = arith.constant 0 : i32
    return %c0_i32, %arg1 : i32, i32
  }
  func.func @transform_2(%arg0: i32, %arg1: i32) -> (i32, i32) {
    %c0_i32 = arith.constant 0 : i32
    %c0_i32_0 = arith.constant 0 : i32
    return %arg1, %c0_i32 : i32, i32
  }
  func.func @transform_3(%arg0: i32, %arg1: i32) -> (i32, i32) {
    %c0_i32 = arith.constant 0 : i32
    return %arg0, %arg1 : i32, i32
  }
  func.func @transform_4(%arg0: i32, %arg1: i32) -> (i32, i32) {
    %c0_i32 = arith.constant 0 : i32
    %c0_i32_0 = arith.constant 0 : i32
    %c0_i32_1 = arith.constant 0 : i32
    return %c0_i32, %c0_i32_0 : i32, i32
  }
  func.func @transform_5(%arg0: i32, %arg1: i32) -> (i32, i32) {
    %c0_i32 = arith.constant 0 : i32
    %c0_i32_0 = arith.constant 0 : i32
    return %arg0, %c0_i32 : i32, i32
  }
}

module attributes {stable_mosaic.version = 11 : i64} {
  func.func @_gat_conv_kernel(%arg0: i32, %arg1: i32, %arg2: memref<16x1xf32, #tpu.memory_space<vmem>>, %arg3: memref<1x16xf32, #tpu.memory_space<vmem>>, %arg4: memref<16x4xbf16, #tpu.memory_space<vmem>>, %arg5: memref<16x16xi8, #tpu.memory_space<vmem>>, %arg6: memref<1x4xf32, #tpu.memory_space<vmem>>, %arg7: memref<16x4xf32, #tpu.memory_space<vmem>>, %arg8: memref<16x1xf32, #tpu.memory_space<vmem>>, %arg9: memref<16x1xf32, #tpu.memory_space<vmem>>, %arg10: memref<16x4xf32, #tpu.memory_space<vmem>>) attributes {dimension_semantics = [#tpu.dimension_semantics<parallel>, #tpu.dimension_semantics<arbitrary>], iteration_bounds = array<i64: 1, 1>, scalar_prefetch = 0 : i64, scratch_operands = 3 : i64, tpu.core_type = #tpu.core_type<tc>, window_params = [{transform_indices = @transform_0, window_bounds = array<i64: 16, 1>}, {transform_indices = @transform_1, window_bounds = array<i64: 1, 16>}, {transform_indices = @transform_2, window_bounds = array<i64: 16, 4>}, {transform_indices = @transform_3, window_bounds = array<i64: 16, 16>}, {pipeline_mode = #tpu.pipeline_mode<synchronous>, transform_indices = @transform_4, window_bounds = array<i64: 1, 4>}, {transform_indices = @transform_5, window_bounds = array<i64: 16, 4>}]} {
    %c0_i32 = arith.constant 0 : i32
    %0 = arith.cmpi eq, %arg1, %c0_i32 : i32
    %1 = arith.extui %0 : i1 to i32
    %c0_i32_0 = arith.constant 0 : i32
    %2 = arith.cmpi ne, %1, %c0_i32_0 : i32
    scf.if %2 {
      %cst_28 = arith.constant -1.000000e+30 : f32
      %48 = vector.broadcast %cst_28 : f32 to vector<16x1xf32>
      %c0_29 = arith.constant 0 : index
      %c0_30 = arith.constant 0 : index
      %49 = vector.load %arg8[%c0_29, %c0_30] : memref<16x1xf32, #tpu.memory_space<vmem>>, vector<16x1xf32>
      tpu.vector_store %arg8[%c0_29, %c0_30], %48 {strides = array<i32>} : memref<16x1xf32, #tpu.memory_space<vmem>>, vector<16x1xf32>,
      %cst_31 = arith.constant 0.000000e+00 : f32
      %50 = vector.broadcast %cst_31 : f32 to vector<16x1xf32>
      %c0_32 = arith.constant 0 : index
      %c0_33 = arith.constant 0 : index
      %51 = vector.load %arg9[%c0_32, %c0_33] : memref<16x1xf32, #tpu.memory_space<vmem>>, vector<16x1xf32>
      tpu.vector_store %arg9[%c0_32, %c0_33], %50 {strides = array<i32>} : memref<16x1xf32, #tpu.memory_space<vmem>>, vector<16x1xf32>,
      %cst_34 = arith.constant 0.000000e+00 : f32
      %52 = vector.broadcast %cst_34 : f32 to vector<16x4xf32>
      %c0_35 = arith.constant 0 : index
      %c0_36 = arith.constant 0 : index
      %53 = vector.load %arg10[%c0_35, %c0_36] : memref<16x4xf32, #tpu.memory_space<vmem>>, vector<16x4xf32>
      tpu.vector_store %arg10[%c0_35, %c0_36], %52 {strides = array<i32>} : memref<16x4xf32, #tpu.memory_space<vmem>>, vector<16x4xf32>,
    } else {
    }
    %c0 = arith.constant 0 : index
    %c0_1 = arith.constant 0 : index
    %3 = vector.load %arg2[%c0, %c0_1] : memref<16x1xf32, #tpu.memory_space<vmem>>, vector<16x1xf32>
    %c0_2 = arith.constant 0 : index
    %c0_3 = arith.constant 0 : index
    %4 = vector.load %arg3[%c0_2, %c0_3] : memref<1x16xf32, #tpu.memory_space<vmem>>, vector<1x16xf32>
    %c0_4 = arith.constant 0 : index
    %c0_5 = arith.constant 0 : index
    %5 = vector.load %arg4[%c0_4, %c0_5] : memref<16x4xbf16, #tpu.memory_space<vmem>>, vector<16x4xbf16>
    %c0_6 = arith.constant 0 : index
    %c0_7 = arith.constant 0 : index
    %6 = vector.load %arg5[%c0_6, %c0_7] : memref<16x16xi8, #tpu.memory_space<vmem>>, vector<16x16xi8>
    %7 = arith.sitofp %6 : vector<16x16xi8> to vector<16x16xf32>
    %cst = arith.constant 1.000000e+00 : f32
    %8 = vector.broadcast %cst : f32 to vector<16x16xf32>
    %9 = arith.subf %8, %7 : vector<16x16xf32>
    %cst_8 = arith.constant -1.000000e+30 : f32
    %10 = vector.broadcast %cst_8 : f32 to vector<16x16xf32>
    %11 = arith.mulf %9, %10 : vector<16x16xf32>
    %12 = vector.broadcast %3 : vector<16x1xf32> to vector<16x16xf32>
    %13 = vector.broadcast %4 : vector<1x16xf32> to vector<16x16xf32>
    %14 = arith.addf %12, %13 : vector<16x16xf32>
    %cst_9 = arith.constant 0.000000e+00 : f32
    %15 = vector.broadcast %cst_9 : f32 to vector<16x16xf32>
    %16 = arith.cmpf oge, %14, %15 : vector<16x16xf32>
    %cst_10 = arith.constant 2.000000e-01 : f32
    %17 = vector.broadcast %cst_10 : f32 to vector<16x16xf32>
    %18 = arith.mulf %17, %14 : vector<16x16xf32>
    %19 = arith.select %16, %14, %18 : vector<16x16xi1>, vector<16x16xf32>
    %20 = arith.addf %19, %11 : vector<16x16xf32>
    %c0_11 = arith.constant 0 : index
    %c0_12 = arith.constant 0 : index
    %21 = vector.load %arg8[%c0_11, %c0_12] : memref<16x1xf32, #tpu.memory_space<vmem>>, vector<16x1xf32>
    %cst_13 = arith.constant dense<0xFF800000> : vector<16xf32>
    %22 = vector.multi_reduction <maximumf>, %20, %cst_13 [1] : vector<16x16xf32> to vector<16xf32>
    %23 = vector.shape_cast %22 : vector<16xf32> to vector<16x1xf32>
    %24 = arith.maximumf %21, %23 : vector<16x1xf32>
    %25 = arith.subf %21, %24 : vector<16x1xf32>
    %26 = math.exp %25 : vector<16x1xf32>
    %27 = vector.broadcast %24 : vector<16x1xf32> to vector<16x16xf32>
    %28 = arith.subf %20, %27 : vector<16x16xf32>
    %29 = math.exp %28 : vector<16x16xf32>
    %30 = arith.mulf %29, %7 : vector<16x16xf32>
    %c0_14 = arith.constant 0 : index
    %c0_15 = arith.constant 0 : index
    %31 = vector.load %arg9[%c0_14, %c0_15] : memref<16x1xf32, #tpu.memory_space<vmem>>, vector<16x1xf32>
    %32 = arith.mulf %26, %31 : vector<16x1xf32>
    %cst_16 = arith.constant dense<0.000000e+00> : vector<16xf32>
    %33 = vector.multi_reduction <add>, %30, %cst_16 [1] : vector<16x16xf32> to vector<16xf32>
    %34 = vector.shape_cast %33 : vector<16xf32> to vector<16x1xf32>
    %35 = arith.addf %32, %34 : vector<16x1xf32>
    %c0_17 = arith.constant 0 : index
    %c0_18 = arith.constant 0 : index
    %36 = vector.load %arg9[%c0_17, %c0_18] : memref<16x1xf32, #tpu.memory_space<vmem>>, vector<16x1xf32>
    tpu.vector_store %arg9[%c0_17, %c0_18], %35 {strides = array<i32>} : memref<16x1xf32, #tpu.memory_space<vmem>>, vector<16x1xf32>,
    %c0_19 = arith.constant 0 : index
    %c0_20 = arith.constant 0 : index
    %37 = vector.load %arg10[%c0_19, %c0_20] : memref<16x4xf32, #tpu.memory_space<vmem>>, vector<16x4xf32>
    %38 = vector.broadcast %26 : vector<16x1xf32> to vector<16x4xf32>
    %39 = arith.mulf %38, %37 : vector<16x4xf32>
    %40 = arith.truncf %30 : vector<16x16xf32> to vector<16x16xbf16>
    %cst_21 = arith.constant dense<0.000000e+00> : vector<16x4xf32>
    %41 = tpu.matmul %40, %5, %cst_21 {dimension_numbers = #tpu.dot_dimension_numbers<[1], [0], [0], [1], [0, 0, 1, 1], [], []>} : vector<16x16xbf16>, vector<16x4xbf16>, vector<16x4xf32> -> vector<16x4xf32>
    %42 = arith.addf %39, %41 : vector<16x4xf32>
    %c0_22 = arith.constant 0 : index
    %c0_23 = arith.constant 0 : index
    %43 = vector.load %arg10[%c0_22, %c0_23] : memref<16x4xf32, #tpu.memory_space<vmem>>, vector<16x4xf32>
    tpu.vector_store %arg10[%c0_22, %c0_23], %42 {strides = array<i32>} : memref<16x4xf32, #tpu.memory_space<vmem>>, vector<16x4xf32>,
    %c0_24 = arith.constant 0 : index
    %c0_25 = arith.constant 0 : index
    %44 = vector.load %arg8[%c0_24, %c0_25] : memref<16x1xf32, #tpu.memory_space<vmem>>, vector<16x1xf32>
    tpu.vector_store %arg8[%c0_24, %c0_25], %24 {strides = array<i32>} : memref<16x1xf32, #tpu.memory_space<vmem>>, vector<16x1xf32>,
    %c0_i32_26 = arith.constant 0 : i32
    %45 = arith.cmpi eq, %arg1, %c0_i32_26 : i32
    %46 = arith.extui %45 : i1 to i32
    %c0_i32_27 = arith.constant 0 : i32
    %47 = arith.cmpi ne, %46, %c0_i32_27 : i32
    scf.if %47 {
      %c0_28 = arith.constant 0 : index
      %c0_29 = arith.constant 0 : index
      %48 = vector.load %arg9[%c0_28, %c0_29] : memref<16x1xf32, #tpu.memory_space<vmem>>, vector<16x1xf32>
      %49 = tpu.reciprocal %48 {approx = true} : vector<16x1xf32> -> vector<16x1xf32>
      %c0_30 = arith.constant 0 : index
      %c0_31 = arith.constant 0 : index
      %50 = vector.load %arg10[%c0_30, %c0_31] : memref<16x4xf32, #tpu.memory_space<vmem>>, vector<16x4xf32>
      %51 = vector.broadcast %49 : vector<16x1xf32> to vector<16x4xf32>
      %52 = arith.mulf %50, %51 : vector<16x4xf32>
      %c0_32 = arith.constant 0 : index
      %c0_33 = arith.constant 0 : index
      %53 = vector.load %arg6[%c0_32, %c0_33] : memref<1x4xf32, #tpu.memory_space<vmem>>, vector<1x4xf32>
      %54 = vector.broadcast %53 : vector<1x4xf32> to vector<16x4xf32>
      %55 = arith.addf %52, %54 : vector<16x4xf32>
      %cst_34 = arith.constant dense<0xFF800000> : vector<16xf32>
      %56 = vector.multi_reduction <maximumf>, %55, %cst_34 [1] : vector<16x4xf32> to vector<16xf32>
      %57 = vector.shape_cast %56 : vector<16xf32> to vector<16x1xf32>
      %58 = vector.broadcast %57 : vector<16x1xf32> to vector<16x4xf32>
      %59 = arith.subf %55, %58 : vector<16x4xf32>
      %60 = math.exp %59 : vector<16x4xf32>
      %cst_35 = arith.constant dense<0.000000e+00> : vector<16xf32>
      %61 = vector.multi_reduction <add>, %60, %cst_35 [1] : vector<16x4xf32> to vector<16xf32>
      %62 = vector.shape_cast %61 : vector<16xf32> to vector<16x1xf32>
      %63 = math.log %62 : vector<16x1xf32>
      %64 = vector.broadcast %63 : vector<16x1xf32> to vector<16x4xf32>
      %65 = arith.subf %59, %64 : vector<16x4xf32>
      %c0_36 = arith.constant 0 : index
      %c0_37 = arith.constant 0 : index
      %66 = vector.load %arg7[%c0_36, %c0_37] : memref<16x4xf32, #tpu.memory_space<vmem>>, vector<16x4xf32>
      tpu.vector_store %arg7[%c0_36, %c0_37], %65 {strides = array<i32>} : memref<16x4xf32, #tpu.memory_space<vmem>>, vector<16x4xf32>,
    } else {
    }
    return
  }
  func.func @transform_0(%arg0: i32, %arg1: i32) -> (i32, i32) {
    %c0_i32 = arith.constant 0 : i32
    %c0_i32_0 = arith.constant 0 : i32
    return %arg0, %c0_i32 : i32, i32
  }
  func.func @transform_1(%arg0: i32, %arg1: i32) -> (i32, i32) {
    %c0_i32 = arith.constant 0 : i32
    %c0_i32_0 = arith.constant 0 : i32
    return %c0_i32, %arg1 : i32, i32
  }
  func.func @transform_2(%arg0: i32, %arg1: i32) -> (i32, i32) {
    %c0_i32 = arith.constant 0 : i32
    %c0_i32_0 = arith.constant 0 : i32
    return %arg1, %c0_i32 : i32, i32
  }
  func.func @transform_3(%arg0: i32, %arg1: i32) -> (i32, i32) {
    %c0_i32 = arith.constant 0 : i32
    return %arg0, %arg1 : i32, i32
  }
  func.func @transform_4(%arg0: i32, %arg1: i32) -> (i32, i32) {
    %c0_i32 = arith.constant 0 : i32
    %c0_i32_0 = arith.constant 0 : i32
    %c0_i32_1 = arith.constant 0 : i32
    return %c0_i32, %c0_i32_0 : i32, i32
  }
  func.func @transform_5(%arg0: i32, %arg1: i32) -> (i32, i32) {
    %c0_i32 = arith.constant 0 : i32
    %c0_i32_0 = arith.constant 0 : i32
    return %arg0, %c0_i32 : i32, i32
  }
}

</mosaic_0001>

<llo_original>
// kernel: gat_forward.3
$region0: #{gat_forward.3}
  #allocation0 [shape = 'u32[]', space=smem, size = 0x4, offset = 0x4, fixed_abs, tag = 'smem constant byte address 0x4 - core index']
  #allocation1 [shape = 'u32[144,128]{1,0:T(1,128)}', space=vmem, size = 0x12000, scoped, tag = 'internal scratch']
  #allocation2 [shape = 'f32[16,1]{1,0:T(8,128)}', space=vmem, size = 0x2000, scoped, tag = 'scratch operand']
  #allocation3 [shape = 'f32[16,1]{1,0:T(8,128)}', space=vmem, size = 0x2000, scoped, tag = 'scratch operand']
  #allocation4 [shape = 'f32[16,4]{1,0:T(8,128)}', space=vmem, size = 0x2000, scoped, tag = 'scratch operand']
  %s0 = inlined_call_operand.vmem [shape: f32[16,1], index: 0, kind: input, shape index: {}]
  %s1 = inlined_call_operand.vmem [shape: f32[1,16], index: 1, kind: input, shape index: {}]
  %s2 = inlined_call_operand.vmem [shape: bf16[16,4], index: 2, kind: input, shape index: {}]
  %s3 = inlined_call_operand.vmem [shape: s8[16,16], index: 3, kind: input, shape index: {}]
  %s4 = inlined_call_operand.vmem [shape: f32[1,4], index: 4, kind: input, shape index: {}]
  %s5 = inlined_call_operand.vmem [shape: f32[16,4], index: 5, kind: output, shape index: {}]
  %s6 = sld [smem:[#allocation0]]
  $region38: #{gat_forward.3} parent=0
    _
  %s8 = ssub.s32 1, %s6
  %s9 = scalar_select 0, %s8, %s6
  // Predicated region
  $region2: #{gat_forward.3} parent=0 // pred_check
    _
  $region3: #{gat_forward.3} parent=0 // pred_check_branch
    %11 = sbr.rel (0) target = $region5
  $region4: #{gat_forward.3} parent=0 // pred_region
    _
  $region5: #{gat_forward.3} parent=0 // pred_fallthru
    _
  // Predicated region
  $region6: #{gat_forward.3} parent=0 // pred_check
    _
  $region7: #{gat_forward.3} parent=0 // pred_check_branch
    %13 = sbr.rel (0) target = $region9
  $region8: #{gat_forward.3} parent=0 // pred_region
    _
  $region9: #{gat_forward.3} parent=0 // pred_fallthru
    _
  // Predicated region
  $region10: #{gat_forward.3} parent=0 // pred_check
    _
  $region11: #{gat_forward.3} parent=0 // pred_check_branch
    %15 = sbr.rel (0) target = $region13
  $region12: #{gat_forward.3} parent=0 // pred_region
    _
  $region13: #{gat_forward.3} parent=0 // pred_fallthru
    _
  // Predicated region
  $region14: #{gat_forward.3} parent=0 // pred_check
    _
  $region15: #{gat_forward.3} parent=0 // pred_check_branch
    %17 = sbr.rel (0) target = $region17
  $region16: #{gat_forward.3} parent=0 // pred_region
    _
  $region17: #{gat_forward.3} parent=0 // pred_fallthru
    _
  // Predicated region
  $region18: #{gat_forward.3} parent=0 // pred_check
    _
  $region19: #{gat_forward.3} parent=0 // pred_check_branch
    %19 = sbr.rel (0) target = $region21
  $region20: #{gat_forward.3} parent=0 // pred_region
    _
  $region21: #{gat_forward.3} parent=0 // pred_fallthru
    _
  %p21 = scmp.eq.s32.totalorder 0, 0
  // Predicated region
  $region22: #{gat_forward.3} parent=0 // pred_check
    %p22 = pneg %p21
  $region23: #{gat_forward.3} parent=0 // pred_check_branch
    %24 = sbr.rel (%p22) target = $region25
  $region24: #{gat_forward.3} parent=0 // pred_region
    %vm25 = vcmask 7168
    %26 = vst.msk [vmem:[#allocation2] sm:$0xff] %vm25, -1e+30
    %27 = vst.msk [vmem:[#allocation2 + $0x8] sm:$0xff] %vm25, -1e+30
    %28 = vst.msk [vmem:[#allocation3] sm:$0xff] %vm25, 0.0
    %29 = vst.msk [vmem:[#allocation3 + $0x8] sm:$0xff] %vm25, 0.0
    %vm30 = vcmask 31744
    %31 = vst.msk [vmem:[#allocation4] sm:$0xff] %vm30, 0.0
    %32 = vst.msk [vmem:[#allocation4 + $0x8] sm:$0xff] %vm30, 0.0
  $region25: #{gat_forward.3} parent=0 // pred_fallthru
    _
  %v33 = vld [vmem:[%s0] sm:$0xff]
  %v34 = vld [vmem:[%s0 + $0x8] sm:$0xff]
  %v35 = vld [vmem:[%s1] sm:$0x1]
  %v36 = vld [vmem:[%s2] sm:$0xf]
  %v37 = vld [vmem:[%s2 + $0x4] sm:$0xf]
  %v38 = vld [vmem:[%s3] sm:$0x3]
  %v39 = vld [vmem:[%s3 + $0x2] sm:$0x3]
  %v40 = vunpack.c.0.s8 %v38
  %v41 = vunpack.c.0.s8 %v39
  %v42 = vcvt.s32.f32 %v40
  %v43 = vcvt.s32.f32 %v41
  %v44 = vsub.f32 1.0, %v42
  %v45 = vsub.f32 1.0, %v43
  %v46 = vmul.f32 %v44, -1e+30
  %v47 = vmul.f32 %v45, -1e+30
  %49 = vset.pattern.permute.xlu0 0
  %50 = vperm.xlu0 %49, %v33
  %v51 = vpop.permute.xlu0 %50
  %54 = vset.pattern.permute.xlu0 0
  %55 = vperm.xlu0 %54, %v34
  %v56 = vpop.permute.xlu0 %55
  %v59 = vlaneseq
  %v60 = vshrl.u32 %v59, 7
  %v61 = vsub.s32 0, %v60
  %v62 = vrot.slane %v35, %v61
  %v64 = vadd.f32 %v51, %v62
  %v65 = vadd.f32 %v56, %v62
  %vm66 = vcmp.ge.f32.partialorder %v64, 0.0
  %vm67 = vcmp.ge.f32.partialorder %v65, 0.0
  %v68 = vmul.f32 %v64, 0.2
  %v69 = vmul.f32 %v65, 0.2
  %v70 = vsel %vm66, %v64, %v68
  %v71 = vsel %vm67, %v65, %v69
  %v72 = vadd.f32 %v70, %v46
  %v73 = vadd.f32 %v71, %v47
  %v74 = vld [vmem:[#allocation2] sm:$0xff]
  %v75 = vld [vmem:[#allocation2 + $0x8] sm:$0xff]
  %vm76 = vcmask 130048
  %v77 = vsel %vm76, %v72, -inf
  %78 = vmax.xlane.f32.xlu0 %v77
  %v79 = vpop.xlane.xlu0 %78
  %v80 = vsel %vm76, %v73, -inf
  %81 = vmax.xlane.f32.xlu0 %v80
  %v82 = vpop.xlane.xlu0 %81
  %v83 = vmax.f32 %v74, %v79
  %v84 = vmax.f32 %v75, %v82
  %v85 = vsub.f32 %v74, %v83
  %v86 = vsub.f32 %v75, %v84
  %v87 = vmul.f32 %v85, 1.442695
  %v88 = vpow.pop %v87
  %v89 = vmul.f32 %v86, 1.442695
  %v90 = vpow.pop %v89
  %92 = vset.pattern.permute.xlu0 0
  %93 = vperm.xlu0 %92, %v83
  %v94 = vpop.permute.xlu0 %93
  %97 = vset.pattern.permute.xlu0 0
  %98 = vperm.xlu0 %97, %v84
  %v99 = vpop.permute.xlu0 %98
  %v101 = vsub.f32 %v72, %v94
  %v102 = vsub.f32 %v73, %v99
  %v103 = vmul.f32 %v101, 1.442695
  %v104 = vpow.pop %v103
  %v105 = vmul.f32 %v102, 1.442695
  %v106 = vpow.pop %v105
  %v107 = vmul.f32 %v104, %v42
  %v108 = vmul.f32 %v106, %v43
  %v109 = vld [vmem:[#allocation3] sm:$0xff]
  %v110 = vld [vmem:[#allocation3 + $0x8] sm:$0xff]
  %v111 = vmul.f32 %v88, %v109
  %v112 = vmul.f32 %v90, %v110
  %v113 = vsel %vm76, %v107, 0.0
  %114 = vadd.xlane.f32.xlu0 %v113
  %v115 = vpop.xlane.xlu0 %114
  %v116 = vsel %vm76, %v108, 0.0
  %117 = vadd.xlane.f32.xlu0 %v116
  %v118 = vpop.xlane.xlu0 %117
  %v119 = vadd.f32 %v111, %v115
  %v120 = vadd.f32 %v112, %v118
  %vm121 = vcmask 7168
  %122 = vst.msk [vmem:[#allocation3] sm:$0xff] %vm121, %v119
  %123 = vst.msk [vmem:[#allocation3 + $0x8] sm:$0xff] %vm121, %v120
  %v124 = vld [vmem:[#allocation4] sm:$0xff]
  %v125 = vld [vmem:[#allocation4 + $0x8] sm:$0xff]
  %127 = vset.pattern.permute.xlu0 0
  %128 = vperm.xlu0 %127, %v88
  %v129 = vpop.permute.xlu0 %128
  %132 = vset.pattern.permute.xlu0 0
  %133 = vperm.xlu0 %132, %v90
  %v134 = vpop.permute.xlu0 %133
  %v136 = vmul.f32 %v129, %v124
  %v137 = vmul.f32 %v134, %v125
  %v138 = vpack.c.bf16 %v108, %v107
  %v141 = vunpack.c.l.b16 %v36
  %v142 = vunpack.c.l.b16 %v37
  %v143 = vpack.c.b16 %v142, %v141
  %v146 = vsel %vm76, %v138, 0
  %148 = vmatprep.subr.bf16.mxu0 0
  %149 = vmatpush1.bf16.msra.mxu0 %v143
  %150 = vmatprep.subr.bf16.mxu0 0
  %151 = vmatpush1.bf16.msra.mxu0 0
  %152 = vmatprep.subr.bf16.mxu0 0
  %153 = vmatpush1.bf16.msra.mxu0 0
  %154 = vmatprep.subr.bf16.mxu0 0
  %155 = vmatpush1.bf16.msra.mxu0 0
  %156 = vmatprep.subr.bf16.mxu0 0
  %157 = vmatpush1.bf16.msra.mxu0 0
  %158 = vmatprep.subr.bf16.mxu0 0
  %159 = vmatpush1.bf16.msra.mxu0 0
  %160 = vmatprep.subr.bf16.mxu0 0
  %161 = vmatpush1.bf16.msra.mxu0 0
  %162 = vmatprep.subr.bf16.mxu0 0
  %163 = vmatpush1.bf16.msra.mxu0 0
  %164 = vmatprep.subr.bf16.mxu0 0
  %165 = vmatpush1.bf16.msra.mxu0 0
  %166 = vmatprep.subr.bf16.mxu0 0
  %167 = vmatpush1.bf16.msra.mxu0 0
  %168 = vmatprep.subr.bf16.mxu0 0
  %169 = vmatpush1.bf16.msra.mxu0 0
  %170 = vmatprep.subr.bf16.mxu0 0
  %171 = vmatpush1.bf16.msra.mxu0 0
  %172 = vmatprep.subr.bf16.mxu0 0
  %173 = vmatpush1.bf16.msra.mxu0 0
  %174 = vmatprep.subr.bf16.mxu0 0
  %175 = vmatpush1.bf16.msra.mxu0 0
  %176 = vmatprep.subr.bf16.mxu0 0
  %177 = vmatpush1.bf16.msra.mxu0 0
  %178 = vmatprep.subr.bf16.mxu0 0
  %179 = vmatpush1.bf16.msra.mxu0 0
  %180 = vmatprep.mubr.bf16.mxu0 0
  %181 = vmatmul.mubr.bf16.gmra.mrb[0].mxu0 %v146
  %v182 = vpop.f32.mrb[0].mxu0
  %v183 = vadd.f32 0.0, %v182
  %v184 = vpop.f32.mrb[0].mxu0
  %v185 = vpop.f32.mrb[0].mxu0
  %v186 = vadd.f32 0.0, %v185
  %v187 = vpop.f32.mrb[0].mxu0
  %188 = vdwg.mxu0
  %v189 = vadd.f32 %v136, %v183
  %v190 = vadd.f32 %v137, %v186
  %vm191 = vcmask 31744
  %192 = vst.msk [vmem:[#allocation4] sm:$0xff] %vm191, %v189
  %193 = vst.msk [vmem:[#allocation4 + $0x8] sm:$0xff] %vm191, %v190
  %194 = vst.msk [vmem:[#allocation2] sm:$0xff] %vm121, %v83
  %195 = vst.msk [vmem:[#allocation2 + $0x8] sm:$0xff] %vm121, %v84
  // Predicated region
  $region26: #{gat_forward.3} parent=0 // pred_check
    %p196 = pneg %p21
  $region27: #{gat_forward.3} parent=0 // pred_check_branch
    %198 = sbr.rel (%p196) target = $region29
  $region28: #{gat_forward.3} parent=0 // pred_region
    %v199 = vld [vmem:[#allocation3] sm:$0xff]
    %v200 = vld [vmem:[#allocation3 + $0x8] sm:$0xff]
    %v201 = vrcp.pop %v199
    %v202 = vrcp.pop %v200
    %v203 = vld [vmem:[#allocation4] sm:$0xff]
    %v204 = vld [vmem:[#allocation4 + $0x8] sm:$0xff]
    %206 = vset.pattern.permute.xlu0 0
    %207 = vperm.xlu0 %206, %v201
    %v208 = vpop.permute.xlu0 %207
    %211 = vset.pattern.permute.xlu0 0
    %212 = vperm.xlu0 %211, %v202
    %v213 = vpop.permute.xlu0 %212
    %v215 = vmul.f32 %v203, %v208
    %v216 = vmul.f32 %v204, %v213
    %v217 = vld [vmem:[%s4] sm:$0x1]
    %v219 = vlaneseq
    %v220 = vshrl.u32 %v219, 7
    %v221 = vsub.s32 0, %v220
    %v222 = vrot.slane %v217, %v221
    %v224 = vadd.f32 %v215, %v222
    %v225 = vadd.f32 %v216, %v222
    %v226 = vsel %vm191, %v224, -inf
    %227 = vmax.xlane.f32.xlu0 %v226
    %v228 = vpop.xlane.xlu0 %227
    %v229 = vsel %vm191, %v225, -inf
    %230 = vmax.xlane.f32.xlu0 %v229
    %v231 = vpop.xlane.xlu0 %230
    %v232 = vsub.f32 %v224, %v228
    %v233 = vsub.f32 %v225, %v231
    %v234 = vmul.f32 %v232, 1.442695
    %v235 = vpow.pop %v234
    %v236 = vmul.f32 %v233, 1.442695
    %v237 = vpow.pop %v236
    %v238 = vsel %vm191, %v235, 0.0
    %239 = vadd.xlane.f32.xlu0 %v238
    %v240 = vpop.xlane.xlu0 %239
    %v241 = vsel %vm191, %v237, 0.0
    %242 = vadd.xlane.f32.xlu0 %v241
    %v243 = vpop.xlane.xlu0 %242
    %v244 = vlog2.pop %v240
    %v245 = vmul.f32 %v244, 0.6931472
    %v246 = vlog2.pop %v243
    %v247 = vmul.f32 %v246, 0.6931472
    %v248 = vsub.f32 %v232, %v245
    %v249 = vsub.f32 %v233, %v247
    %250 = vst.msk [vmem:[%s5] sm:$0xff] %vm191, %v248
    %251 = vst.msk [vmem:[%s5 + $0x8] sm:$0xff] %vm191, %v249
  $region29: #{gat_forward.3} parent=0 // pred_fallthru
    _
  // Predicated region
  $region30: #{gat_forward.3} parent=0 // pred_check
    _
  $region31: #{gat_forward.3} parent=0 // pred_check_branch
    %253 = sbr.rel (0) target = $region33
  $region32: #{gat_forward.3} parent=0 // pred_region
    _
  $region33: #{gat_forward.3} parent=0 // pred_fallthru
    _
  // Predicated region
  $region34: #{gat_forward.3} parent=0 // pred_check
    _
  $region35: #{gat_forward.3} parent=0 // pred_check_branch
    %255 = sbr.rel (0) target = $region37
  $region36: #{gat_forward.3} parent=0 // pred_region
    _
  $region37: #{gat_forward.3} parent=0 // pred_fallthru
    _

// kernel: gat_forward.2
$region0: #{gat_forward.2}
  #allocation0 [shape = 'u32[]', space=smem, size = 0x4, offset = 0x4, fixed_abs, tag = 'smem constant byte address 0x4 - core index']
  #allocation1 [shape = 'u32[144,128]{1,0:T(1,128)}', space=vmem, size = 0x12000, scoped, tag = 'internal scratch']
  #allocation2 [shape = 'f32[16,4]{1,0:T(8,128)}', space=vmem, size = 0x2000, scoped, tag = 'scratch operand']
  #allocation3 [shape = 'f32[16,4]{1,0:T(8,128)}', space=vmem, size = 0x2000, scoped, tag = 'scratch operand']
  #allocation4 [shape = 'f32[16,32]{1,0:T(8,128)}', space=vmem, size = 0x2000, scoped, tag = 'scratch operand']
  %s0 = inlined_call_operand.vmem [shape: f32[16,4], index: 0, kind: input, shape index: {}]
  %s1 = inlined_call_operand.vmem [shape: f32[4,16], index: 1, kind: input, shape index: {}]
  %s2 = inlined_call_operand.vmem [shape: bf16[16,32], index: 2, kind: input, shape index: {}]
  %s3 = inlined_call_operand.vmem [shape: s8[16,16], index: 3, kind: input, shape index: {}]
  %s4 = inlined_call_operand.vmem [shape: f32[1,32], index: 4, kind: input, shape index: {}]
  %s5 = inlined_call_operand.vmem [shape: f32[16,32], index: 5, kind: output, shape index: {}]
  %s6 = sld [smem:[#allocation0]]
  $region38: #{gat_forward.2} parent=0
    _
  %s8 = ssub.s32 1, %s6
  %s9 = scalar_select 0, %s8, %s6
  // Predicated region
  $region2: #{gat_forward.2} parent=0 // pred_check
    _
  $region3: #{gat_forward.2} parent=0 // pred_check_branch
    %11 = sbr.rel (0) target = $region5
  $region4: #{gat_forward.2} parent=0 // pred_region
    _
  $region5: #{gat_forward.2} parent=0 // pred_fallthru
    _
  // Predicated region
  $region6: #{gat_forward.2} parent=0 // pred_check
    _
  $region7: #{gat_forward.2} parent=0 // pred_check_branch
    %13 = sbr.rel (0) target = $region9
  $region8: #{gat_forward.2} parent=0 // pred_region
    _
  $region9: #{gat_forward.2} parent=0 // pred_fallthru
    _
  // Predicated region
  $region10: #{gat_forward.2} parent=0 // pred_check
    _
  $region11: #{gat_forward.2} parent=0 // pred_check_branch
    %15 = sbr.rel (0) target = $region13
  $region12: #{gat_forward.2} parent=0 // pred_region
    _
  $region13: #{gat_forward.2} parent=0 // pred_fallthru
    _
  // Predicated region
  $region14: #{gat_forward.2} parent=0 // pred_check
    _
  $region15: #{gat_forward.2} parent=0 // pred_check_branch
    %17 = sbr.rel (0) target = $region17
  $region16: #{gat_forward.2} parent=0 // pred_region
    _
  $region17: #{gat_forward.2} parent=0 // pred_fallthru
    _
  // Predicated region
  $region18: #{gat_forward.2} parent=0 // pred_check
    _
  $region19: #{gat_forward.2} parent=0 // pred_check_branch
    %19 = sbr.rel (0) target = $region21
  $region20: #{gat_forward.2} parent=0 // pred_region
    _
  $region21: #{gat_forward.2} parent=0 // pred_fallthru
    _
  %p21 = scmp.eq.s32.totalorder 0, 0
  // Predicated region
  $region22: #{gat_forward.2} parent=0 // pred_check
    %p22 = pneg %p21
  $region23: #{gat_forward.2} parent=0 // pred_check_branch
    %24 = sbr.rel (%p22) target = $region25
  $region24: #{gat_forward.2} parent=0 // pred_region
    %vm25 = vcmask 31744
    %26 = vst.msk [vmem:[#allocation2] sm:$0xff] %vm25, -1e+30
    %27 = vst.msk [vmem:[#allocation2 + $0x8] sm:$0xff] %vm25, -1e+30
    %28 = vst.msk [vmem:[#allocation3] sm:$0xff] %vm25, 0.0
    %29 = vst.msk [vmem:[#allocation3 + $0x8] sm:$0xff] %vm25, 0.0
    %vm30 = vcmask 261120
    %31 = vst.msk [vmem:[#allocation4] sm:$0xff] %vm30, 0.0
    %32 = vst.msk [vmem:[#allocation4 + $0x8] sm:$0xff] %vm30, 0.0
  $region25: #{gat_forward.2} parent=0 // pred_fallthru
    _
  %v33 = vld [vmem:[%s0] sm:$0xff]
  %v34 = vld [vmem:[%s0 + $0x8] sm:$0xff]
  %v35 = vld [vmem:[%s1] sm:$0xf]
  %v36 = vld [vmem:[%s2] sm:$0xf]
  %v37 = vld [vmem:[%s2 + $0x4] sm:$0xf]
  %v38 = vld [vmem:[%s3] sm:$0x3]
  %v39 = vld [vmem:[%s3 + $0x2] sm:$0x3]
  %v40 = vunpack.c.0.s8 %v38
  %v41 = vunpack.c.0.s8 %v39
  %v42 = vcvt.s32.f32 %v40
  %v43 = vcvt.s32.f32 %v41
  %v44 = vsub.f32 1.0, %v42
  %v45 = vsub.f32 1.0, %v43
  %v46 = vmul.f32 %v44, -1e+30
  %v47 = vmul.f32 %v45, -1e+30
  %49 = vset.pattern.permute.xlu0 0
  %50 = vperm.xlu0 %49, %v33
  %v51 = vpop.permute.xlu0 %50
  %54 = vset.pattern.permute.xlu0 0
  %55 = vperm.xlu0 %54, %v34
  %v56 = vpop.permute.xlu0 %55
  %v58 = vlaneseq
  %v59 = vshrl.u32 %v58, 7
  %v60 = vsub.s32 0, %v59
  %v61 = vrot.slane %v35, %v60
  %v62 = vadd.f32 %v51, %v61
  %v63 = vadd.f32 %v56, %v61
  %vm64 = vcmp.ge.f32.partialorder %v62, 0.0
  %vm65 = vcmp.ge.f32.partialorder %v63, 0.0
  %v66 = vmul.f32 %v62, 0.2
  %v67 = vmul.f32 %v63, 0.2
  %v68 = vsel %vm64, %v62, %v66
  %v69 = vsel %vm65, %v63, %v67
  %v70 = vadd.f32 %v68, %v46
  %v71 = vadd.f32 %v69, %v47
  %v72 = vld [vmem:[#allocation2] sm:$0xff]
  %v73 = vld [vmem:[#allocation2 + $0x8] sm:$0xff]
  %vm74 = vcmask 130048
  %v75 = vsel %vm74, %v70, -inf
  %76 = vmax.xlane.f32.xlu0 %v75
  %v77 = vpop.xlane.xlu0 %76
  %v78 = vsel %vm74, %v71, -inf
  %79 = vmax.xlane.f32.xlu0 %v78
  %v80 = vpop.xlane.xlu0 %79
  %v81 = vmax.f32 %v72, %v77
  %v82 = vmax.f32 %v73, %v80
  %v83 = vsub.f32 %v72, %v81
  %v84 = vsub.f32 %v73, %v82
  %v85 = vmul.f32 %v83, 1.442695
  %v86 = vpow.pop %v85
  %v87 = vmul.f32 %v84, 1.442695
  %v88 = vpow.pop %v87
  %90 = vset.pattern.permute.xlu0 0
  %91 = vperm.xlu0 %90, %v81
  %v92 = vpop.permute.xlu0 %91
  %95 = vset.pattern.permute.xlu0 0
  %96 = vperm.xlu0 %95, %v82
  %v97 = vpop.permute.xlu0 %96
  %v99 = vsub.f32 %v70, %v92
  %v100 = vsub.f32 %v71, %v97
  %v101 = vmul.f32 %v99, 1.442695
  %v102 = vpow.pop %v101
  %v103 = vmul.f32 %v100, 1.442695
  %v104 = vpow.pop %v103
  %v105 = vmul.f32 %v102, %v42
  %v106 = vmul.f32 %v104, %v43
  %v107 = vld [vmem:[#allocation3] sm:$0xff]
  %v108 = vld [vmem:[#allocation3 + $0x8] sm:$0xff]
  %v109 = vmul.f32 %v86, %v107
  %v110 = vmul.f32 %v88, %v108
  %v111 = vsel %vm74, %v105, 0.0
  %112 = vadd.xlane.f32.xlu0 %v111
  %v113 = vpop.xlane.xlu0 %112
  %v114 = vsel %vm74, %v106, 0.0
  %115 = vadd.xlane.f32.xlu0 %v114
  %v116 = vpop.xlane.xlu0 %115
  %v117 = vadd.f32 %v109, %v113
  %v118 = vadd.f32 %v110, %v116
  %vm119 = vcmask 7168
  %120 = vst.msk [vmem:[#allocation3] sm:$0xff] %vm119, %v117
  %121 = vst.msk [vmem:[#allocation3 + $0x8] sm:$0xff] %vm119, %v118
  %v122 = vld [vmem:[#allocation4] sm:$0xff]
  %v123 = vld [vmem:[#allocation4 + $0x8] sm:$0xff]
  %125 = vset.pattern.permute.xlu0 0
  %126 = vperm.xlu0 %125, %v86
  %v127 = vpop.permute.xlu0 %126
  %130 = vset.pattern.permute.xlu0 0
  %131 = vperm.xlu0 %130, %v88
  %v132 = vpop.permute.xlu0 %131
  %v134 = vmul.f32 %v127, %v122
  %v135 = vmul.f32 %v132, %v123
  %v136 = vpack.c.bf16 %v106, %v105
  %v139 = vunpack.c.l.b16 %v36
  %v140 = vunpack.c.l.b16 %v37
  %v141 = vpack.c.b16 %v140, %v139
  %v144 = vsel %vm74, %v136, 0
  %146 = vmatprep.subr.bf16.mxu0 0
  %147 = vmatpush1.bf16.msra.mxu0 %v141
  %148 = vmatprep.subr.bf16.mxu0 0
  %149 = vmatpush1.bf16.msra.mxu0 0
  %150 = vmatprep.subr.bf16.mxu0 0
  %151 = vmatpush1.bf16.msra.mxu0 0
  %152 = vmatprep.subr.bf16.mxu0 0
  %153 = vmatpush1.bf16.msra.mxu0 0
  %154 = vmatprep.subr.bf16.mxu0 0
  %155 = vmatpush1.bf16.msra.mxu0 0
  %156 = vmatprep.subr.bf16.mxu0 0
  %157 = vmatpush1.bf16.msra.mxu0 0
  %158 = vmatprep.subr.bf16.mxu0 0
  %159 = vmatpush1.bf16.msra.mxu0 0
  %160 = vmatprep.subr.bf16.mxu0 0
  %161 = vmatpush1.bf16.msra.mxu0 0
  %162 = vmatprep.subr.bf16.mxu0 0
  %163 = vmatpush1.bf16.msra.mxu0 0
  %164 = vmatprep.subr.bf16.mxu0 0
  %165 = vmatpush1.bf16.msra.mxu0 0
  %166 = vmatprep.subr.bf16.mxu0 0
  %167 = vmatpush1.bf16.msra.mxu0 0
  %168 = vmatprep.subr.bf16.mxu0 0
  %169 = vmatpush1.bf16.msra.mxu0 0
  %170 = vmatprep.subr.bf16.mxu0 0
  %171 = vmatpush1.bf16.msra.mxu0 0
  %172 = vmatprep.subr.bf16.mxu0 0
  %173 = vmatpush1.bf16.msra.mxu0 0
  %174 = vmatprep.subr.bf16.mxu0 0
  %175 = vmatpush1.bf16.msra.mxu0 0
  %176 = vmatprep.subr.bf16.mxu0 0
  %177 = vmatpush1.bf16.msra.mxu0 0
  %178 = vmatprep.mubr.bf16.mxu0 0
  %179 = vmatmul.mubr.bf16.gmra.mrb[0].mxu0 %v144
  %v180 = vpop.f32.mrb[0].mxu0
  %v181 = vadd.f32 0.0, %v180
  %v182 = vpop.f32.mrb[0].mxu0
  %v183 = vpop.f32.mrb[0].mxu0
  %v184 = vadd.f32 0.0, %v183
  %v185 = vpop.f32.mrb[0].mxu0
  %186 = vdwg.mxu0
  %v187 = vadd.f32 %v134, %v181
  %v188 = vadd.f32 %v135, %v184
  %vm189 = vcmask 64512
  %190 = vst.msk [vmem:[#allocation4] sm:$0xff] %vm189, %v187
  %191 = vst.msk [vmem:[#allocation4 + $0x8] sm:$0xff] %vm189, %v188
  %192 = vst.msk [vmem:[#allocation2] sm:$0xff] %vm119, %v81
  %193 = vst.msk [vmem:[#allocation2 + $0x8] sm:$0xff] %vm119, %v82
  %194 = vset.pattern.permute.xlu0 1
  %195 = vperm.xlu0 %194, %v33
  %v196 = vpop.permute.xlu0 %195
  %198 = vset.pattern.permute.xlu0 1
  %199 = vperm.xlu0 %198, %v34
  %v200 = vpop.permute.xlu0 %199
  %v202 = vlaneseq
  %v203 = vshrl.u32 %v202, 7
  %v204 = vsub.s32 1, %v203
  %v205 = vrot.slane %v35, %v204
  %v206 = vadd.f32 %v196, %v205
  %v207 = vadd.f32 %v200, %v205
  %vm208 = vcmp.ge.f32.partialorder %v206, 0.0
  %vm209 = vcmp.ge.f32.partialorder %v207, 0.0
  %v210 = vmul.f32 %v206, 0.2
  %v211 = vmul.f32 %v207, 0.2
  %v212 = vsel %vm208, %v206, %v210
  %v213 = vsel %vm209, %v207, %v211
  %v214 = vadd.f32 %v212, %v46
  %v215 = vadd.f32 %v213, %v47
  %v216 = vld [vmem:[#allocation2] sm:$0xff]
  %v217 = vld [vmem:[#allocation2 + $0x8] sm:$0xff]
  %v218 = vsel %vm74, %v214, -inf
  %219 = vmax.xlane.f32.xlu0 %v218
  %v220 = vpop.xlane.xlu0 %219
  %v221 = vsel %vm74, %v215, -inf
  %222 = vmax.xlane.f32.xlu0 %v221
  %v223 = vpop.xlane.xlu0 %222
  %v224 = vmax.f32 %v216, %v220
  %v225 = vmax.f32 %v217, %v223
  %v226 = vsub.f32 %v216, %v224
  %v227 = vsub.f32 %v217, %v225
  %v228 = vmul.f32 %v226, 1.442695
  %v229 = vpow.pop %v228
  %v230 = vmul.f32 %v227, 1.442695
  %v231 = vpow.pop %v230
  %233 = vset.pattern.permute.xlu0 1
  %234 = vperm.xlu0 %233, %v224
  %v235 = vpop.permute.xlu0 %234
  %238 = vset.pattern.permute.xlu0 1
  %239 = vperm.xlu0 %238, %v225
  %v240 = vpop.permute.xlu0 %239
  %v242 = vsub.f32 %v214, %v235
  %v243 = vsub.f32 %v215, %v240
  %v244 = vmul.f32 %v242, 1.442695
  %v245 = vpow.pop %v244
  %v246 = vmul.f32 %v243, 1.442695
  %v247 = vpow.pop %v246
  %v248 = vmul.f32 %v245, %v42
  %v249 = vmul.f32 %v247, %v43
  %v250 = vld [vmem:[#allocation3] sm:$0xff]
  %v251 = vld [vmem:[#allocation3 + $0x8] sm:$0xff]
  %v252 = vmul.f32 %v229, %v250
  %v253 = vmul.f32 %v231, %v251
  %v254 = vsel %vm74, %v248, 0.0
  %255 = vadd.xlane.f32.xlu0 %v254
  %v256 = vpop.xlane.xlu0 %255
  %v257 = vsel %vm74, %v249, 0.0
  %258 = vadd.xlane.f32.xlu0 %v257
  %v259 = vpop.xlane.xlu0 %258
  %v260 = vadd.f32 %v252, %v256
  %v261 = vadd.f32 %v253, %v259
  %vm262 = vcmask 15368
  %263 = vst.msk [vmem:[#allocation3] sm:$0xff] %vm262, %v260
  %264 = vst.msk [vmem:[#allocation3 + $0x8] sm:$0xff] %vm262, %v261
  %v265 = vld [vmem:[#allocation4] sm:$0xff]
  %v266 = vld [vmem:[#allocation4 + $0x8] sm:$0xff]
  %268 = vset.pattern.permute.xlu0 1
  %269 = vperm.xlu0 %268, %v229
  %v270 = vpop.permute.xlu0 %269
  %273 = vset.pattern.permute.xlu0 1
  %274 = vperm.xlu0 %273, %v231
  %v275 = vpop.permute.xlu0 %274
  %v277 = vmul.f32 %v270, %v265
  %v278 = vmul.f32 %v275, %v266
  %v279 = vpack.c.bf16 %v249, %v248
  %280 = vrot.lane.b32.xlu0 %v141, 120
  %v281 = vpop.permute.xlu0 %280
  %v284 = vsel %vm74, %v279, 0
  %286 = vmatprep.subr.bf16.mxu0 0
  %287 = vmatpush1.bf16.msra.mxu0 %v281
  %288 = vmatprep.subr.bf16.mxu0 0
  %289 = vmatpush1.bf16.msra.mxu0 0
  %290 = vmatprep.subr.bf16.mxu0 0
  %291 = vmatpush1.bf16.msra.mxu0 0
  %292 = vmatprep.subr.bf16.mxu0 0
  %293 = vmatpush1.bf16.msra.mxu0 0
  %294 = vmatprep.subr.bf16.mxu0 0
  %295 = vmatpush1.bf16.msra.mxu0 0
  %296 = vmatprep.subr.bf16.mxu0 0
  %297 = vmatpush1.bf16.msra.mxu0 0
  %298 = vmatprep.subr.bf16.mxu0 0
  %299 = vmatpush1.bf16.msra.mxu0 0
  %300 = vmatprep.subr.bf16.mxu0 0
  %301 = vmatpush1.bf16.msra.mxu0 0
  %302 = vmatprep.subr.bf16.mxu0 0
  %303 = vmatpush1.bf16.msra.mxu0 0
  %304 = vmatprep.subr.bf16.mxu0 0
  %305 = vmatpush1.bf16.msra.mxu0 0
  %306 = vmatprep.subr.bf16.mxu0 0
  %307 = vmatpush1.bf16.msra.mxu0 0
  %308 = vmatprep.subr.bf16.mxu0 0
  %309 = vmatpush1.bf16.msra.mxu0 0
  %310 = vmatprep.subr.bf16.mxu0 0
  %311 = vmatpush1.bf16.msra.mxu0 0
  %312 = vmatprep.subr.bf16.mxu0 0
  %313 = vmatpush1.bf16.msra.mxu0 0
  %314 = vmatprep.subr.bf16.mxu0 0
  %315 = vmatpush1.bf16.msra.mxu0 0
  %316 = vmatprep.subr.bf16.mxu0 0
  %317 = vmatpush1.bf16.msra.mxu0 0
  %318 = vmatprep.mubr.bf16.mxu0 0
  %319 = vmatmul.mubr.bf16.gmra.mrb[0].mxu0 %v284
  %v320 = vpop.f32.mrb[0].mxu0
  %v321 = vadd.f32 0.0, %v320
  %v322 = vpop.f32.mrb[0].mxu0
  %v323 = vpop.f32.mrb[0].mxu0
  %v324 = vadd.f32 0.0, %v323
  %v325 = vpop.f32.mrb[0].mxu0
  %326 = vdwg.mxu0
  %329 = vrot.lane.b32.xlu0 %v321, 8
  %v330 = vpop.permute.xlu0 %329
  %331 = vrot.lane.b32.xlu0 %v324, 8
  %v332 = vpop.permute.xlu0 %331
  %v335 = vadd.f32 %v277, %v330
  %v336 = vadd.f32 %v278, %v332
  %vm337 = vcmask 130112
  %338 = vst.msk [vmem:[#allocation4] sm:$0xff] %vm337, %v335
  %339 = vst.msk [vmem:[#allocation4 + $0x8] sm:$0xff] %vm337, %v336
  %340 = vst.msk [vmem:[#allocation2] sm:$0xff] %vm262, %v224
  %341 = vst.msk [vmem:[#allocation2 + $0x8] sm:$0xff] %vm262, %v225
  %342 = vset.pattern.permute.xlu0 2
  %343 = vperm.xlu0 %342, %v33
  %v344 = vpop.permute.xlu0 %343
  %346 = vset.pattern.permute.xlu0 2
  %347 = vperm.xlu0 %346, %v34
  %v348 = vpop.permute.xlu0 %347
  %v350 = vlaneseq
  %v351 = vshrl.u32 %v350, 7
  %v352 = vsub.s32 2, %v351
  %v353 = vrot.slane %v35, %v352
  %v354 = vadd.f32 %v344, %v353
  %v355 = vadd.f32 %v348, %v353
  %vm356 = vcmp.ge.f32.partialorder %v354, 0.0
  %vm357 = vcmp.ge.f32.partialorder %v355, 0.0
  %v358 = vmul.f32 %v354, 0.2
  %v359 = vmul.f32 %v355, 0.2
  %v360 = vsel %vm356, %v354, %v358
  %v361 = vsel %vm357, %v355, %v359
  %v362 = vadd.f32 %v360, %v46
  %v363 = vadd.f32 %v361, %v47
  %v364 = vld [vmem:[#allocation2] sm:$0xff]
  %v365 = vld [vmem:[#allocation2 + $0x8] sm:$0xff]
  %v366 = vsel %vm74, %v362, -inf
  %367 = vmax.xlane.f32.xlu0 %v366
  %v368 = vpop.xlane.xlu0 %367
  %v369 = vsel %vm74, %v363, -inf
  %370 = vmax.xlane.f32.xlu0 %v369
  %v371 = vpop.xlane.xlu0 %370
  %v372 = vmax.f32 %v364, %v368
  %v373 = vmax.f32 %v365, %v371
  %v374 = vsub.f32 %v364, %v372
  %v375 = vsub.f32 %v365, %v373
  %v376 = vmul.f32 %v374, 1.442695
  %v377 = vpow.pop %v376
  %v378 = vmul.f32 %v375, 1.442695
  %v379 = vpow.pop %v378
  %381 = vset.pattern.permute.xlu0 2
  %382 = vperm.xlu0 %381, %v372
  %v383 = vpop.permute.xlu0 %382
  %386 = vset.pattern.permute.xlu0 2
  %387 = vperm.xlu0 %386, %v373
  %v388 = vpop.permute.xlu0 %387
  %v390 = vsub.f32 %v362, %v383
  %v391 = vsub.f32 %v363, %v388
  %v392 = vmul.f32 %v390, 1.442695
  %v393 = vpow.pop %v392
  %v394 = vmul.f32 %v391, 1.442695
  %v395 = vpow.pop %v394
  %v396 = vmul.f32 %v393, %v42
  %v397 = vmul.f32 %v395, %v43
  %v398 = vld [vmem:[#allocation3] sm:$0xff]
  %v399 = vld [vmem:[#allocation3 + $0x8] sm:$0xff]
  %v400 = vmul.f32 %v377, %v398
  %v401 = vmul.f32 %v379, %v399
  %v402 = vsel %vm74, %v396, 0.0
  %403 = vadd.xlane.f32.xlu0 %v402
  %v404 = vpop.xlane.xlu0 %403
  %v405 = vsel %vm74, %v397, 0.0
  %406 = vadd.xlane.f32.xlu0 %v405
  %v407 = vpop.xlane.xlu0 %406
  %v408 = vadd.f32 %v400, %v404
  %v409 = vadd.f32 %v401, %v407
  %vm410 = vcmask 23568
  %411 = vst.msk [vmem:[#allocation3] sm:$0xff] %vm410, %v408
  %412 = vst.msk [vmem:[#allocation3 + $0x8] sm:$0xff] %vm410, %v409
  %v413 = vld [vmem:[#allocation4] sm:$0xff]
  %v414 = vld [vmem:[#allocation4 + $0x8] sm:$0xff]
  %416 = vset.pattern.permute.xlu0 2
  %417 = vperm.xlu0 %416, %v377
  %v418 = vpop.permute.xlu0 %417
  %421 = vset.pattern.permute.xlu0 2
  %422 = vperm.xlu0 %421, %v379
  %v423 = vpop.permute.xlu0 %422
  %v425 = vmul.f32 %v418, %v413
  %v426 = vmul.f32 %v423, %v414
  %v427 = vpack.c.bf16 %v397, %v396
  %428 = vrot.lane.b32.xlu0 %v141, 112
  %v429 = vpop.permute.xlu0 %428
  %v432 = vsel %vm74, %v427, 0
  %434 = vmatprep.subr.bf16.mxu0 0
  %435 = vmatpush1.bf16.msra.mxu0 %v429
  %436 = vmatprep.subr.bf16.mxu0 0
  %437 = vmatpush1.bf16.msra.mxu0 0
  %438 = vmatprep.subr.bf16.mxu0 0
  %439 = vmatpush1.bf16.msra.mxu0 0
  %440 = vmatprep.subr.bf16.mxu0 0
  %441 = vmatpush1.bf16.msra.mxu0 0
  %442 = vmatprep.subr.bf16.mxu0 0
  %443 = vmatpush1.bf16.msra.mxu0 0
  %444 = vmatprep.subr.bf16.mxu0 0
  %445 = vmatpush1.bf16.msra.mxu0 0
  %446 = vmatprep.subr.bf16.mxu0 0
  %447 = vmatpush1.bf16.msra.mxu0 0
  %448 = vmatprep.subr.bf16.mxu0 0
  %449 = vmatpush1.bf16.msra.mxu0 0
  %450 = vmatprep.subr.bf16.mxu0 0
  %451 = vmatpush1.bf16.msra.mxu0 0
  %452 = vmatprep.subr.bf16.mxu0 0
  %453 = vmatpush1.bf16.msra.mxu0 0
  %454 = vmatprep.subr.bf16.mxu0 0
  %455 = vmatpush1.bf16.msra.mxu0 0
  %456 = vmatprep.subr.bf16.mxu0 0
  %457 = vmatpush1.bf16.msra.mxu0 0
  %458 = vmatprep.subr.bf16.mxu0 0
  %459 = vmatpush1.bf16.msra.mxu0 0
  %460 = vmatprep.subr.bf16.mxu0 0
  %461 = vmatpush1.bf16.msra.mxu0 0
  %462 = vmatprep.subr.bf16.mxu0 0
  %463 = vmatpush1.bf16.msra.mxu0 0
  %464 = vmatprep.subr.bf16.mxu0 0
  %465 = vmatpush1.bf16.msra.mxu0 0
  %466 = vmatprep.mubr.bf16.mxu0 0
  %467 = vmatmul.mubr.bf16.gmra.mrb[0].mxu0 %v432
  %v468 = vpop.f32.mrb[0].mxu0
  %v469 = vadd.f32 0.0, %v468
  %v470 = vpop.f32.mrb[0].mxu0
  %v471 = vpop.f32.mrb[0].mxu0
  %v472 = vadd.f32 0.0, %v471
  %v473 = vpop.f32.mrb[0].mxu0
  %474 = vdwg.mxu0
  %477 = vrot.lane.b32.xlu0 %v469, 16
  %v478 = vpop.permute.xlu0 %477
  %479 = vrot.lane.b32.xlu0 %v472, 16
  %v480 = vpop.permute.xlu0 %479
  %v483 = vadd.f32 %v425, %v478
  %v484 = vadd.f32 %v426, %v480
  %vm485 = vcmask 195712
  %486 = vst.msk [vmem:[#allocation4] sm:$0xff] %vm485, %v483
  %487 = vst.msk [vmem:[#allocation4 + $0x8] sm:$0xff] %vm485, %v484
  %488 = vst.msk [vmem:[#allocation2] sm:$0xff] %vm410, %v372
  %489 = vst.msk [vmem:[#allocation2 + $0x8] sm:$0xff] %vm410, %v373
  %490 = vset.pattern.permute.xlu0 3
  %491 = vperm.xlu0 %490, %v33
  %v492 = vpop.permute.xlu0 %491
  %494 = vset.pattern.permute.xlu0 3
  %495 = vperm.xlu0 %494, %v34
  %v496 = vpop.permute.xlu0 %495
  %v498 = vlaneseq
  %v499 = vshrl.u32 %v498, 7
  %v500 = vsub.s32 3, %v499
  %v501 = vrot.slane %v35, %v500
  %v502 = vadd.f32 %v492, %v501
  %v503 = vadd.f32 %v496, %v501
  %vm504 = vcmp.ge.f32.partialorder %v502, 0.0
  %vm505 = vcmp.ge.f32.partialorder %v503, 0.0
  %v506 = vmul.f32 %v502, 0.2
  %v507 = vmul.f32 %v503, 0.2
  %v508 = vsel %vm504, %v502, %v506
  %v509 = vsel %vm505, %v503, %v507
  %v510 = vadd.f32 %v508, %v46
  %v511 = vadd.f32 %v509, %v47
  %v512 = vld [vmem:[#allocation2] sm:$0xff]
  %v513 = vld [vmem:[#allocation2 + $0x8] sm:$0xff]
  %v514 = vsel %vm74, %v510, -inf
  %515 = vmax.xlane.f32.xlu0 %v514
  %v516 = vpop.xlane.xlu0 %515
  %v517 = vsel %vm74, %v511, -inf
  %518 = vmax.xlane.f32.xlu0 %v517
  %v519 = vpop.xlane.xlu0 %518
  %v520 = vmax.f32 %v512, %v516
  %v521 = vmax.f32 %v513, %v519
  %v522 = vsub.f32 %v512, %v520
  %v523 = vsub.f32 %v513, %v521
  %v524 = vmul.f32 %v522, 1.442695
  %v525 = vpow.pop %v524
  %v526 = vmul.f32 %v523, 1.442695
  %v527 = vpow.pop %v526
  %529 = vset.pattern.permute.xlu0 3
  %530 = vperm.xlu0 %529, %v520
  %v531 = vpop.permute.xlu0 %530
  %534 = vset.pattern.permute.xlu0 3
  %535 = vperm.xlu0 %534, %v521
  %v536 = vpop.permute.xlu0 %535
  %v538 = vsub.f32 %v510, %v531
  %v539 = vsub.f32 %v511, %v536
  %v540 = vmul.f32 %v538, 1.442695
  %v541 = vpow.pop %v540
  %v542 = vmul.f32 %v539, 1.442695
  %v543 = vpow.pop %v542
  %v544 = vmul.f32 %v541, %v42
  %v545 = vmul.f32 %v543, %v43
  %v546 = vld [vmem:[#allocation3] sm:$0xff]
  %v547 = vld [vmem:[#allocation3 + $0x8] sm:$0xff]
  %v548 = vmul.f32 %v525, %v546
  %v549 = vmul.f32 %v527, %v547
  %v550 = vsel %vm74, %v544, 0.0
  %551 = vadd.xlane.f32.xlu0 %v550
  %v552 = vpop.xlane.xlu0 %551
  %v553 = vsel %vm74, %v545, 0.0
  %554 = vadd.xlane.f32.xlu0 %v553
  %v555 = vpop.xlane.xlu0 %554
  %v556 = vadd.f32 %v548, %v552
  %v557 = vadd.f32 %v549, %v555
  %vm558 = vcmask 31768
  %559 = vst.msk [vmem:[#allocation3] sm:$0xff] %vm558, %v556
  %560 = vst.msk [vmem:[#allocation3 + $0x8] sm:$0xff] %vm558, %v557
  %v561 = vld [vmem:[#allocation4] sm:$0xff]
  %v562 = vld [vmem:[#allocation4 + $0x8] sm:$0xff]
  %564 = vset.pattern.permute.xlu0 3
  %565 = vperm.xlu0 %564, %v525
  %v566 = vpop.permute.xlu0 %565
  %569 = vset.pattern.permute.xlu0 3
  %570 = vperm.xlu0 %569, %v527
  %v571 = vpop.permute.xlu0 %570
  %v573 = vmul.f32 %v566, %v561
  %v574 = vmul.f32 %v571, %v562
  %v575 = vpack.c.bf16 %v545, %v544
  %576 = vrot.lane.b32.xlu0 %v141, 104
  %v577 = vpop.permute.xlu0 %576
  %v580 = vsel %vm74, %v575, 0
  %582 = vmatprep.subr.bf16.mxu0 0
  %583 = vmatpush1.bf16.msra.mxu0 %v577
  %584 = vmatprep.subr.bf16.mxu0 0
  %585 = vmatpush1.bf16.msra.mxu0 0
  %586 = vmatprep.subr.bf16.mxu0 0
  %587 = vmatpush1.bf16.msra.mxu0 0
  %588 = vmatprep.subr.bf16.mxu0 0
  %589 = vmatpush1.bf16.msra.mxu0 0
  %590 = vmatprep.subr.bf16.mxu0 0
  %591 = vmatpush1.bf16.msra.mxu0 0
  %592 = vmatprep.subr.bf16.mxu0 0
  %593 = vmatpush1.bf16.msra.mxu0 0
  %594 = vmatprep.subr.bf16.mxu0 0
  %595 = vmatpush1.bf16.msra.mxu0 0
  %596 = vmatprep.subr.bf16.mxu0 0
  %597 = vmatpush1.bf16.msra.mxu0 0
  %598 = vmatprep.subr.bf16.mxu0 0
  %599 = vmatpush1.bf16.msra.mxu0 0
  %600 = vmatprep.subr.bf16.mxu0 0
  %601 = vmatpush1.bf16.msra.mxu0 0
  %602 = vmatprep.subr.bf16.mxu0 0
  %603 = vmatpush1.bf16.msra.mxu0 0
  %604 = vmatprep.subr.bf16.mxu0 0
  %605 = vmatpush1.bf16.msra.mxu0 0
  %606 = vmatprep.subr.bf16.mxu0 0
  %607 = vmatpush1.bf16.msra.mxu0 0
  %608 = vmatprep.subr.bf16.mxu0 0
  %609 = vmatpush1.bf16.msra.mxu0 0
  %610 = vmatprep.subr.bf16.mxu0 0
  %611 = vmatpush1.bf16.msra.mxu0 0
  %612 = vmatprep.subr.bf16.mxu0 0
  %613 = vmatpush1.bf16.msra.mxu0 0
  %614 = vmatprep.mubr.bf16.mxu0 0
  %615 = vmatmul.mubr.bf16.gmra.mrb[0].mxu0 %v580
  %v616 = vpop.f32.mrb[0].mxu0
  %v617 = vadd.f32 0.0, %v616
  %v618 = vpop.f32.mrb[0].mxu0
  %v619 = vpop.f32.mrb[0].mxu0
  %v620 = vadd.f32 0.0, %v619
  %v621 = vpop.f32.mrb[0].mxu0
  %622 = vdwg.mxu0
  %625 = vrot.lane.b32.xlu0 %v617, 24
  %v626 = vpop.permute.xlu0 %625
  %627 = vrot.lane.b32.xlu0 %v620, 24
  %v628 = vpop.permute.xlu0 %627
  %v631 = vadd.f32 %v573, %v626
  %v632 = vadd.f32 %v574, %v628
  %vm633 = vcmask 261312
  %634 = vst.msk [vmem:[#allocation4] sm:$0xff] %vm633, %v631
  %635 = vst.msk [vmem:[#allocation4 + $0x8] sm:$0xff] %vm633, %v632
  %636 = vst.msk [vmem:[#allocation2] sm:$0xff] %vm558, %v520
  %637 = vst.msk [vmem:[#allocation2 + $0x8] sm:$0xff] %vm558, %v521
  // Predicated region
  $region26: #{gat_forward.2} parent=0 // pred_check
    %p638 = pneg %p21
  $region27: #{gat_forward.2} parent=0 // pred_check_branch
    %640 = sbr.rel (%p638) target = $region29
  $region28: #{gat_forward.2} parent=0 // pred_region
    %v641 = vld [vmem:[#allocation3] sm:$0xff]
    %v642 = vld [vmem:[#allocation3 + $0x8] sm:$0xff]
    %v643 = vrcp.pop %v641
    %v644 = vrcp.pop %v642
    %v645 = vld [vmem:[#allocation4] sm:$0xff]
    %v646 = vld [vmem:[#allocation4 + $0x8] sm:$0xff]
    %648 = vset.pattern.permute.xlu0 0
    %649 = vperm.xlu0 %648, %v643
    %v650 = vpop.permute.xlu0 %649
    %653 = vset.pattern.permute.xlu0 0
    %654 = vperm.xlu0 %653, %v644
    %v655 = vpop.permute.xlu0 %654
    %v657 = vmul.f32 %v645, %v650
    %v658 = vmul.f32 %v646, %v655
    %659 = vset.pattern.permute.xlu0 1
    %660 = vperm.xlu0 %659, %v643
    %v661 = vpop.permute.xlu0 %660
    %663 = vset.pattern.permute.xlu0 1
    %664 = vperm.xlu0 %663, %v644
    %v665 = vpop.permute.xlu0 %664
    %v667 = vmul.f32 %v645, %v661
    %v668 = vmul.f32 %v646, %v665
    %669 = vset.pattern.permute.xlu0 2
    %670 = vperm.xlu0 %669, %v643
    %v671 = vpop.permute.xlu0 %670
    %673 = vset.pattern.permute.xlu0 2
    %674 = vperm.xlu0 %673, %v644
    %v675 = vpop.permute.xlu0 %674
    %v677 = vmul.f32 %v645, %v671
    %v678 = vmul.f32 %v646, %v675
    %679 = vset.pattern.permute.xlu0 3
    %680 = vperm.xlu0 %679, %v643
    %v681 = vpop.permute.xlu0 %680
    %683 = vset.pattern.permute.xlu0 3
    %684 = vperm.xlu0 %683, %v644
    %v685 = vpop.permute.xlu0 %684
    %v687 = vmul.f32 %v645, %v681
    %v688 = vmul.f32 %v646, %v685
    %v689 = vsel %vm189, %v657, %v667
    %v690 = vsel %vm189, %v658, %v668
    %v691 = vsel %vm74, %v689, %v677
    %v692 = vsel %vm74, %v690, %v678
    %vm693 = vcmask 195584
    %v694 = vsel %vm693, %v691, %v687
    %v695 = vsel %vm693, %v692, %v688
    %v696 = vld [vmem:[%s4] sm:$0x1]
    %v698 = vlaneseq
    %v699 = vshrl.u32 %v698, 7
    %v700 = vsub.s32 0, %v699
    %v701 = vrot.slane %v696, %v700
    %v703 = vadd.f32 %v694, %v701
    %v704 = vadd.f32 %v695, %v701
    %vm705 = vcmp.gt.f32.partialorder %v703, 0.0
    %vm706 = vcmp.gt.f32.partialorder %v704, 0.0
    %v707 = vmin.f32 %v703, 0.0
    %v708 = vmin.f32 %v704, 0.0
    %v709 = vmul.f32 %v707, 1.442695
    %v710 = vpow.pop %v709
    %v711 = vmul.f32 %v708, 1.442695
    %v712 = vpow.pop %v711
    %v713 = vsub.f32 %v710, 1.0
    %v714 = vsub.f32 %v712, 1.0
    %v715 = vsel %vm705, %v703, %v713
    %v716 = vsel %vm706, %v704, %v714
    %vm717 = vcmask 261120
    %718 = vst.msk [vmem:[%s5] sm:$0xff] %vm717, %v715
    %719 = vst.msk [vmem:[%s5 + $0x8] sm:$0xff] %vm717, %v716
  $region29: #{gat_forward.2} parent=0 // pred_fallthru
    _
  // Predicated region
  $region30: #{gat_forward.2} parent=0 // pred_check
    _
  $region31: #{gat_forward.2} parent=0 // pred_check_branch
    %721 = sbr.rel (0) target = $region33
  $region32: #{gat_forward.2} parent=0 // pred_region
    _
  $region33: #{gat_forward.2} parent=0 // pred_fallthru
    _
  // Predicated region
  $region34: #{gat_forward.2} parent=0 // pred_check
    _
  $region35: #{gat_forward.2} parent=0 // pred_check_branch
    %723 = sbr.rel (0) target = $region37
  $region36: #{gat_forward.2} parent=0 // pred_region
    _
  $region37: #{gat_forward.2} parent=0 // pred_fallthru
    _

</llo_original>
